<compile_context>
chip_gen: v7x
topology: tpu7x:2x2x1
jax: 0.10.0
libtpu: 0.0.40
codegen_flags: <defaults>
</compile_context>

<pallas_src>
import jax
import jax.numpy as jnp
from jax.experimental import pallas as pl
from jax.experimental.pallas import tpu as pltpu

EPS = 1e-5  # nn.BatchNorm2d default eps


# --------------------------------------------------------------------------
# Kernel 1: conv (banded matmuls) + bias, plus partial batch statistics.
# --------------------------------------------------------------------------
def conv_stats_kernel(xp_ref, wb_ref, bias_ref, y_ref, s1_ref, s2_ref):
    """One batch element per grid step.

    xp_ref  : (1, H+2, (W+2)*Cin)  zero-padded input rows (lane dim = (W+2)*Cin)
    wb_ref  : (3, (W+2)*Cin, W*Cout) banded 3x3 weights (one band per dy)
    bias_ref: (1, W*Cout)           conv bias tiled across W
    y_ref   : (1, H, W*Cout)        conv output (pre-BN)
    s1_ref  : (1, 1, W*Cout)        per-step row-sum of y
    s2_ref  : (1, 1, W*Cout)        per-step row-sum of y*y
    """
    Hp = xp_ref.shape[1]
    H = Hp - 2

    xp = xp_ref[0]                                            # (H+2, (W+2)*Cin)

    # 3 MXU matmuls (K = (W+2)*Cin), one per dy tap, accumulated in f32.
    acc = jnp.dot(xp[0:H, :], wb_ref[0], preferred_element_type=jnp.float32)
    acc = acc + jnp.dot(xp[1:H + 1, :], wb_ref[1],
                        preferred_element_type=jnp.float32)
    acc = acc + jnp.dot(xp[2:H + 2, :], wb_ref[2],
                        preferred_element_type=jnp.float32)
    acc = acc + bias_ref[...]                                 # (1, W*Cout) bcast

    y_ref[0] = acc
    # Partial stats for the two-phase (training-mode) BatchNorm.
    s1_ref[0] = jnp.sum(acc, axis=0, keepdims=True)
    s2_ref[0] = jnp.sum(acc * acc, axis=0, keepdims=True)


# --------------------------------------------------------------------------
# Kernel 2: elementwise batch-norm (precomputed scale/shift) + SiLU.
# --------------------------------------------------------------------------
def bn_silu_kernel(y_ref, sc_ref, sh_ref, o_ref):
    y = y_ref[...] * sc_ref[...] + sh_ref[...]
    o_ref[...] = y * jax.nn.sigmoid(y)


# --------------------------------------------------------------------------
# Wrapper helpers
# --------------------------------------------------------------------------
def _band_weights(w_hwio, W):
    """Fold the 3 dx taps into a banded matrix per dy.

    w_hwio: (3, 3, Cin, Cout) -> (3, (W+2)*Cin, W*Cout)
    band[dy, wi*Cin+ci, wo*Cout+co] = w[dy, wi-wo, ci, co] if 0 <= wi-wo <= 2 else 0
    """
    kh, kw, Cin, Cout = w_hwio.shape
    wi = jnp.arange(W + 2)[:, None]
    wo = jnp.arange(W)[None, :]
    band = jnp.zeros((kh, W + 2, Cin, W, Cout), jnp.float32)
    for dx in range(kw):
        mask = (wi - wo == dx).astype(jnp.float32)            # (W+2, W)
        band = band + (mask[None, :, None, :, None]
                       * w_hwio[:, dx][:, None, :, None, :].astype(jnp.float32))
    return band.reshape(kh, (W + 2) * Cin, W * Cout)


def _pick_row_tile(rows):
    for t in (512, 256, 128, 64, 32, 16, 8):
        if rows % t == 0:
            return t
    return rows


def _conv_bn_silu_block(xp_rows, w_hwio, b, g, be, N, H, W):
    """One Conv3x3 + BatchNorm(batch stats) + SiLU block.

    xp_rows: (N, H+2, (W+2)*Cin) f32, already zero padded, lane-flattened rows.
    Returns (N, H, W, Cout) f32.
    """
    Cin, Cout = w_hwio.shape[2], w_hwio.shape[3]
    Kin = (W + 2) * Cin
    WCout = W * Cout

    wband = _band_weights(w_hwio, W)                               # (3, Kin, WCout)
    bias_lane = jnp.tile(b.astype(jnp.float32), W).reshape(1, WCout)

    # ---- Phase 1: conv + partial batch stats, grid over N (parallel) --------
    conv_cost = pl.CostEstimate(
        flops=int(2 * N * H * 3 * Kin * WCout),
        transcendentals=0,
        bytes_accessed=int(4 * (N * (H + 2) * Kin + 3 * Kin * WCout
                                + WCout + N * H * WCout + 2 * N * WCout)),
    )
    y, s1, s2 = pl.pallas_call(
        conv_stats_kernel,
        out_shape=(jax.ShapeDtypeStruct((N, H, WCout), jnp.float32),
                   jax.ShapeDtypeStruct((N, 1, WCout), jnp.float32),
                   jax.ShapeDtypeStruct((N, 1, WCout), jnp.float32)),
        grid=(N,),
        in_specs=[pl.BlockSpec((1, H + 2, Kin), lambda n: (n, 0, 0)),
                  pl.BlockSpec((3, Kin, WCout), lambda n: (0, 0, 0)),
                  pl.BlockSpec((1, WCout), lambda n: (0, 0))],
        out_specs=(pl.BlockSpec((1, H, WCout), lambda n: (n, 0, 0)),
                   pl.BlockSpec((1, 1, WCout), lambda n: (n, 0, 0)),
                   pl.BlockSpec((1, 1, WCout), lambda n: (n, 0, 0))),
        compiler_params=pltpu.CompilerParams(
            dimension_semantics=("parallel",),
            vmem_limit_bytes=32 * 1024 * 1024),
        cost_estimate=conv_cost,
    )(xp_rows, wband, bias_lane)

    # ---- Tiny glue: fold partial stats into per-channel batch statistics ----
    cnt = float(N * H * W)
    s1c = s1.reshape(N, W, Cout).sum(axis=(0, 1))
    s2c = s2.reshape(N, W, Cout).sum(axis=(0, 1))
    mean = s1c / cnt
    # One-pass E[x^2]-mean^2; fine in f32 at post-conv activation magnitudes.
    var = s2c / cnt - mean * mean
    scale = g.astype(jnp.float32) * jax.lax.rsqrt(var + EPS)
    shift = be.astype(jnp.float32) - mean * scale
    scale_lane = jnp.tile(scale, W).reshape(1, WCout)
    shift_lane = jnp.tile(shift, W).reshape(1, WCout)

    # ---- Phase 2: normalize + SiLU, tiled over flattened rows ---------------
    R = N * H
    TR = _pick_row_tile(R)
    y2 = y.reshape(R, WCout)
    bn_cost = pl.CostEstimate(
        flops=int(3 * R * WCout),
        transcendentals=int(R * WCout),
        bytes_accessed=int(4 * (2 * R * WCout + 2 * WCout)),
    )
    out = pl.pallas_call(
        bn_silu_kernel,
        out_shape=jax.ShapeDtypeStruct((R, WCout), jnp.float32),
        grid=(R // TR,),
        in_specs=[pl.BlockSpec((TR, WCout), lambda i: (i, 0)),
                  pl.BlockSpec((1, WCout), lambda i: (0, 0)),
                  pl.BlockSpec((1, WCout), lambda i: (0, 0))],
        out_specs=pl.BlockSpec((TR, WCout), lambda i: (i, 0)),
        compiler_params=pltpu.CompilerParams(
            dimension_semantics=("parallel",),
            vmem_limit_bytes=32 * 1024 * 1024),
        cost_estimate=bn_cost,
    )(y2, scale_lane, shift_lane)
    return out.reshape(N, H, W, Cout)


def _pad_rows(x_nhwc):
    """'same' padding + flatten each row to a lane-dense (W+2)*C vector."""
    n, h, w, c = x_nhwc.shape
    xp = jnp.pad(x_nhwc, ((0, 0), (1, 1), (1, 1), (0, 0)))
    return xp.reshape(n, h + 2, (w + 2) * c)


def double_conv(x_nchw, params):
    """Forward pass of DoubleConv. Input / output in PyTorch NCHW layout."""
    w1, b1, g1, be1, w2, b2, g2, be2 = params
    N, _, H, W = x_nchw.shape
    x = jnp.transpose(x_nchw, (0, 2, 3, 1)).astype(jnp.float32)   # NCHW -> NHWC
    w1_hwio = jnp.transpose(w1, (2, 3, 1, 0)).astype(jnp.float32)  # OIHW -> HWIO
    w2_hwio = jnp.transpose(w2, (2, 3, 1, 0)).astype(jnp.float32)
    y1 = _conv_bn_silu_block(_pad_rows(x), w1_hwio, b1, g1, be1, N, H, W)
    y2 = _conv_bn_silu_block(_pad_rows(y1), w2_hwio, b2, g2, be2, N, H, W)
    return jnp.transpose(y2, (0, 3, 1, 2))                        # NHWC -> NCHW


# ---------------- pure-JAX reference (for verification) ----------------
def _ref_block(x, w, b, g, be):
    y = jax.lax.conv_general_dilated(
        x, w, window_strides=(1, 1), padding="SAME",
        dimension_numbers=("NCHW", "OIHW", "NCHW"))
    y = y + b[None, :, None, None]
    mean = jnp.mean(y, axis=(0, 2, 3), keepdims=True)
    var = jnp.mean((y - mean) ** 2, axis=(0, 2, 3), keepdims=True)
    y = (y - mean) * jax.lax.rsqrt(var + EPS) * g[None, :, None, None] \
        + be[None, :, None, None]
    return y * jax.nn.sigmoid(y)


def ref_double_conv(x, params):
    w1, b1, g1, be1, w2, b2, g2, be2 = params
    return _ref_block(_ref_block(x, w1, b1, g1, be1), w2, b2, g2, be2)


if __name__ == "__main__":
    # DoubleConv(in_f=4, out_f=8, normalization='batch') at small shapes.
    N, Cin, Cout, H, W = 2, 4, 8, 16, 16
    key = jax.random.PRNGKey(0)
    kx, kw1, kb1, kw2, kb2 = jax.random.split(key, 5)

    x = jax.random.normal(kx, (N, Cin, H, W), jnp.float32)

    # PyTorch-shaped parameters: conv weights OIHW, bias (Cout,)
    w1 = jax.random.normal(kw1, (Cout, Cin, 3, 3), jnp.float32) * 0.1
    b1 = jax.random.normal(kb1, (Cout,), jnp.float32) * 0.1
    w2 = jax.random.normal(kw2, (Cout, Cout, 3, 3), jnp.float32) * 0.1
    b2 = jax.random.normal(kb2, (Cout,), jnp.float32) * 0.1
    # BatchNorm2d default init: weight=1, bias=0
    g1 = jnp.ones((Cout,), jnp.float32)
    be1 = jnp.zeros((Cout,), jnp.float32)
    g2 = jnp.ones((Cout,), jnp.float32)
    be2 = jnp.zeros((Cout,), jnp.float32)

    params = (w1, b1, g1, be1, w2, b2, g2, be2)

    fwd = jax.jit(double_conv)
    out = jax.block_until_ready(fwd(x, params))

    ref = ref_double_conv(x, params)
    err = float(jnp.max(jnp.abs(out - ref)))
    assert out.shape == (N, Cout, H, W), out.shape
    assert jnp.allclose(out, ref, atol=5e-4, rtol=5e-4), f"max abs err {err}"

    print("KERNEL_OK")
</pallas_src>

<mosaic_0001>
module attributes {stable_mosaic.version = 11 : i64} {
  func.func @conv_stats_kernel(%arg0: i32, %arg1: memref<1x18x72xf32, #tpu.memory_space<vmem>>, %arg2: memref<3x72x128xf32, #tpu.memory_space<vmem>>, %arg3: memref<1x128xf32, #tpu.memory_space<vmem>>, %arg4: memref<1x16x128xf32, #tpu.memory_space<vmem>>, %arg5: memref<1x1x128xf32, #tpu.memory_space<vmem>>, %arg6: memref<1x1x128xf32, #tpu.memory_space<vmem>>) attributes {dimension_semantics = [#tpu.dimension_semantics<parallel>], iteration_bounds = array<i64: 2>, scalar_prefetch = 0 : i64, scratch_operands = 0 : i64, tpu.core_type = #tpu.core_type<tc>, window_params = [{transform_indices = @transform_0, window_bounds = array<i64: 1, 18, 72>}, {pipeline_mode = #tpu.pipeline_mode<synchronous>, transform_indices = @transform_1, window_bounds = array<i64: 3, 72, 128>}, {pipeline_mode = #tpu.pipeline_mode<synchronous>, transform_indices = @transform_2, window_bounds = array<i64: 1, 128>}, {transform_indices = @transform_3, window_bounds = array<i64: 1, 16, 128>}, {transform_indices = @transform_4, window_bounds = array<i64: 1, 1, 128>}, {transform_indices = @transform_5, window_bounds = array<i64: 1, 1, 128>}]} {
    %c0 = arith.constant 0 : index
    %c0_0 = arith.constant 0 : index
    %c0_1 = arith.constant 0 : index
    %0 = vector.load %arg1[%c0, %c0_0, %c0_1] : memref<1x18x72xf32, #tpu.memory_space<vmem>>, vector<1x18x72xf32>
    %1 = vector.shape_cast %0 : vector<1x18x72xf32> to vector<18x72xf32>
    %2 = vector.extract_strided_slice %1 {offsets = [0, 0], sizes = [16, 72], strides = [1, 1]} : vector<18x72xf32> to vector<16x72xf32>
    %c0_2 = arith.constant 0 : index
    %c0_3 = arith.constant 0 : index
    %c0_4 = arith.constant 0 : index
    %3 = vector.load %arg2[%c0_2, %c0_3, %c0_4] : memref<3x72x128xf32, #tpu.memory_space<vmem>>, vector<1x72x128xf32>
    %4 = vector.shape_cast %3 : vector<1x72x128xf32> to vector<72x128xf32>
    %cst = arith.constant dense<0.000000e+00> : vector<16x128xf32>
    %5 = tpu.matmul %2, %4, %cst {dimension_numbers = #tpu.dot_dimension_numbers<[1], [0], [0], [1], [0, 0, 1, 1], [], []>} : vector<16x72xf32>, vector<72x128xf32>, vector<16x128xf32> -> vector<16x128xf32>
    %6 = vector.extract_strided_slice %1 {offsets = [1, 0], sizes = [16, 72], strides = [1, 1]} : vector<18x72xf32> to vector<16x72xf32>
    %c1 = arith.constant 1 : index
    %c0_5 = arith.constant 0 : index
    %c0_6 = arith.constant 0 : index
    %7 = vector.load %arg2[%c1, %c0_5, %c0_6] : memref<3x72x128xf32, #tpu.memory_space<vmem>>, vector<1x72x128xf32>
    %8 = vector.shape_cast %7 : vector<1x72x128xf32> to vector<72x128xf32>
    %cst_7 = arith.constant dense<0.000000e+00> : vector<16x128xf32>
    %9 = tpu.matmul %6, %8, %cst_7 {dimension_numbers = #tpu.dot_dimension_numbers<[1], [0], [0], [1], [0, 0, 1, 1], [], []>} : vector<16x72xf32>, vector<72x128xf32>, vector<16x128xf32> -> vector<16x128xf32>
    %10 = arith.addf %5, %9 : vector<16x128xf32>
    %11 = vector.extract_strided_slice %1 {offsets = [2, 0], sizes = [16, 72], strides = [1, 1]} : vector<18x72xf32> to vector<16x72xf32>
    %c2 = arith.constant 2 : index
    %c0_8 = arith.constant 0 : index
    %c0_9 = arith.constant 0 : index
    %12 = vector.load %arg2[%c2, %c0_8, %c0_9] : memref<3x72x128xf32, #tpu.memory_space<vmem>>, vector<1x72x128xf32>
    %13 = vector.shape_cast %12 : vector<1x72x128xf32> to vector<72x128xf32>
    %cst_10 = arith.constant dense<0.000000e+00> : vector<16x128xf32>
    %14 = tpu.matmul %11, %13, %cst_10 {dimension_numbers = #tpu.dot_dimension_numbers<[1], [0], [0], [1], [0, 0, 1, 1], [], []>} : vector<16x72xf32>, vector<72x128xf32>, vector<16x128xf32> -> vector<16x128xf32>
    %15 = arith.addf %10, %14 : vector<16x128xf32>
    %c0_11 = arith.constant 0 : index
    %c0_12 = arith.constant 0 : index
    %16 = vector.load %arg3[%c0_11, %c0_12] : memref<1x128xf32, #tpu.memory_space<vmem>>, vector<1x128xf32>
    %17 = vector.broadcast %16 : vector<1x128xf32> to vector<16x128xf32>
    %18 = arith.addf %15, %17 : vector<16x128xf32>
    %c0_13 = arith.constant 0 : index
    %c0_14 = arith.constant 0 : index
    %c0_15 = arith.constant 0 : index
    %19 = vector.load %arg4[%c0_13, %c0_14, %c0_15] : memref<1x16x128xf32, #tpu.memory_space<vmem>>, vector<1x16x128xf32>
    %20 = vector.shape_cast %19 : vector<1x16x128xf32> to vector<16x128xf32>
    %21 = vector.shape_cast %18 : vector<16x128xf32> to vector<1x16x128xf32>
    tpu.vector_store %arg4[%c0_13, %c0_14, %c0_15], %21 {strides = array<i32>} : memref<1x16x128xf32, #tpu.memory_space<vmem>>, vector<1x16x128xf32>,
    %cst_16 = arith.constant dense<0.000000e+00> : vector<128xf32>
    %22 = vector.multi_reduction <add>, %18, %cst_16 [0] : vector<16x128xf32> to vector<128xf32>
    %23 = vector.shape_cast %22 : vector<128xf32> to vector<1x128xf32>
    %c0_17 = arith.constant 0 : index
    %c0_18 = arith.constant 0 : index
    %c0_19 = arith.constant 0 : index
    %24 = vector.load %arg5[%c0_17, %c0_18, %c0_19] : memref<1x1x128xf32, #tpu.memory_space<vmem>>, vector<1x1x128xf32>
    %25 = vector.shape_cast %24 : vector<1x1x128xf32> to vector<1x128xf32>
    %26 = vector.shape_cast %23 : vector<1x128xf32> to vector<1x1x128xf32>
    tpu.vector_store %arg5[%c0_17, %c0_18, %c0_19], %26 {strides = array<i32>} : memref<1x1x128xf32, #tpu.memory_space<vmem>>, vector<1x1x128xf32>,
    %27 = arith.mulf %18, %18 : vector<16x128xf32>
    %cst_20 = arith.constant dense<0.000000e+00> : vector<128xf32>
    %28 = vector.multi_reduction <add>, %27, %cst_20 [0] : vector<16x128xf32> to vector<128xf32>
    %29 = vector.shape_cast %28 : vector<128xf32> to vector<1x128xf32>
    %c0_21 = arith.constant 0 : index
    %c0_22 = arith.constant 0 : index
    %c0_23 = arith.constant 0 : index
    %30 = vector.load %arg6[%c0_21, %c0_22, %c0_23] : memref<1x1x128xf32, #tpu.memory_space<vmem>>, vector<1x1x128xf32>
    %31 = vector.shape_cast %30 : vector<1x1x128xf32> to vector<1x128xf32>
    %32 = vector.shape_cast %29 : vector<1x128xf32> to vector<1x1x128xf32>
    tpu.vector_store %arg6[%c0_21, %c0_22, %c0_23], %32 {strides = array<i32>} : memref<1x1x128xf32, #tpu.memory_space<vmem>>, vector<1x1x128xf32>,
    return
  }
  func.func @transform_0(%arg0: i32) -> (i32, i32, i32) {
    %c0_i32 = arith.constant 0 : i32
    %c0_i32_0 = arith.constant 0 : i32
    %c0_i32_1 = arith.constant 0 : i32
    return %arg0, %c0_i32, %c0_i32_0 : i32, i32, i32
  }
  func.func @transform_1(%arg0: i32) -> (i32, i32, i32) {
    %c0_i32 = arith.constant 0 : i32
    %c0_i32_0 = arith.constant 0 : i32
    %c0_i32_1 = arith.constant 0 : i32
    %c0_i32_2 = arith.constant 0 : i32
    return %c0_i32, %c0_i32_0, %c0_i32_1 : i32, i32, i32
  }
  func.func @transform_2(%arg0: i32) -> (i32, i32) {
    %c0_i32 = arith.constant 0 : i32
    %c0_i32_0 = arith.constant 0 : i32
    %c0_i32_1 = arith.constant 0 : i32
    return %c0_i32, %c0_i32_0 : i32, i32
  }
  func.func @transform_3(%arg0: i32) -> (i32, i32, i32) {
    %c0_i32 = arith.constant 0 : i32
    %c0_i32_0 = arith.constant 0 : i32
    %c0_i32_1 = arith.constant 0 : i32
    return %arg0, %c0_i32, %c0_i32_0 : i32, i32, i32
  }
  func.func @transform_4(%arg0: i32) -> (i32, i32, i32) {
    %c0_i32 = arith.constant 0 : i32
    %c0_i32_0 = arith.constant 0 : i32
    %c0_i32_1 = arith.constant 0 : i32
    return %arg0, %c0_i32, %c0_i32_0 : i32, i32, i32
  }
  func.func @transform_5(%arg0: i32) -> (i32, i32, i32) {
    %c0_i32 = arith.constant 0 : i32
    %c0_i32_0 = arith.constant 0 : i32
    %c0_i32_1 = arith.constant 0 : i32
    return %arg0, %c0_i32, %c0_i32_0 : i32, i32, i32
  }
}

module attributes {stable_mosaic.version = 11 : i64} {
  func.func @bn_silu_kernel(%arg0: i32, %arg1: memref<32x128xf32, #tpu.memory_space<vmem>>, %arg2: memref<1x128xf32, #tpu.memory_space<vmem>>, %arg3: memref<1x128xf32, #tpu.memory_space<vmem>>, %arg4: memref<32x128xf32, #tpu.memory_space<vmem>>) attributes {dimension_semantics = [#tpu.dimension_semantics<parallel>], iteration_bounds = array<i64: 1>, scalar_prefetch = 0 : i64, scratch_operands = 0 : i64, tpu.core_type = #tpu.core_type<tc>, window_params = [{transform_indices = @transform_0, window_bounds = array<i64: 32, 128>}, {pipeline_mode = #tpu.pipeline_mode<synchronous>, transform_indices = @transform_1, window_bounds = array<i64: 1, 128>}, {pipeline_mode = #tpu.pipeline_mode<synchronous>, transform_indices = @transform_2, window_bounds = array<i64: 1, 128>}, {transform_indices = @transform_3, window_bounds = array<i64: 32, 128>}]} {
    %c0 = arith.constant 0 : index
    %c0_0 = arith.constant 0 : index
    %0 = vector.load %arg1[%c0, %c0_0] : memref<32x128xf32, #tpu.memory_space<vmem>>, vector<32x128xf32>
    %c0_1 = arith.constant 0 : index
    %c0_2 = arith.constant 0 : index
    %1 = vector.load %arg2[%c0_1, %c0_2] : memref<1x128xf32, #tpu.memory_space<vmem>>, vector<1x128xf32>
    %2 = vector.broadcast %1 : vector<1x128xf32> to vector<32x128xf32>
    %3 = arith.mulf %0, %2 : vector<32x128xf32>
    %c0_3 = arith.constant 0 : index
    %c0_4 = arith.constant 0 : index
    %4 = vector.load %arg3[%c0_3, %c0_4] : memref<1x128xf32, #tpu.memory_space<vmem>>, vector<1x128xf32>
    %5 = vector.broadcast %4 : vector<1x128xf32> to vector<32x128xf32>
    %6 = arith.addf %3, %5 : vector<32x128xf32>
    %7 = arith.negf %6 : vector<32x128xf32>
    %8 = math.exp %7 : vector<32x128xf32>
    %cst = arith.constant 1.000000e+00 : f32
    %9 = vector.broadcast %cst : f32 to vector<32x128xf32>
    %10 = arith.addf %9, %8 : vector<32x128xf32>
    %11 = arith.divf %9, %10 : vector<32x128xf32>
    %12 = arith.mulf %6, %11 : vector<32x128xf32>
    %c0_5 = arith.constant 0 : index
    %c0_6 = arith.constant 0 : index
    %13 = vector.load %arg4[%c0_5, %c0_6] : memref<32x128xf32, #tpu.memory_space<vmem>>, vector<32x128xf32>
    tpu.vector_store %arg4[%c0_5, %c0_6], %12 {strides = array<i32>} : memref<32x128xf32, #tpu.memory_space<vmem>>, vector<32x128xf32>,
    return
  }
  func.func @transform_0(%arg0: i32) -> (i32, i32) {
    %c0_i32 = arith.constant 0 : i32
    %c0_i32_0 = arith.constant 0 : i32
    return %arg0, %c0_i32 : i32, i32
  }
  func.func @transform_1(%arg0: i32) -> (i32, i32) {
    %c0_i32 = arith.constant 0 : i32
    %c0_i32_0 = arith.constant 0 : i32
    %c0_i32_1 = arith.constant 0 : i32
    return %c0_i32, %c0_i32_0 : i32, i32
  }
  func.func @transform_2(%arg0: i32) -> (i32, i32) {
    %c0_i32 = arith.constant 0 : i32
    %c0_i32_0 = arith.constant 0 : i32
    %c0_i32_1 = arith.constant 0 : i32
    return %c0_i32, %c0_i32_0 : i32, i32
  }
  func.func @transform_3(%arg0: i32) -> (i32, i32) {
    %c0_i32 = arith.constant 0 : i32
    %c0_i32_0 = arith.constant 0 : i32
    return %arg0, %c0_i32 : i32, i32
  }
}

module attributes {stable_mosaic.version = 11 : i64} {
  func.func @conv_stats_kernel(%arg0: i32, %arg1: memref<1x18x144xf32, #tpu.memory_space<vmem>>, %arg2: memref<3x144x128xf32, #tpu.memory_space<vmem>>, %arg3: memref<1x128xf32, #tpu.memory_space<vmem>>, %arg4: memref<1x16x128xf32, #tpu.memory_space<vmem>>, %arg5: memref<1x1x128xf32, #tpu.memory_space<vmem>>, %arg6: memref<1x1x128xf32, #tpu.memory_space<vmem>>) attributes {dimension_semantics = [#tpu.dimension_semantics<parallel>], iteration_bounds = array<i64: 2>, scalar_prefetch = 0 : i64, scratch_operands = 0 : i64, tpu.core_type = #tpu.core_type<tc>, window_params = [{transform_indices = @transform_0, window_bounds = array<i64: 1, 18, 144>}, {pipeline_mode = #tpu.pipeline_mode<synchronous>, transform_indices = @transform_1, window_bounds = array<i64: 3, 144, 128>}, {pipeline_mode = #tpu.pipeline_mode<synchronous>, transform_indices = @transform_2, window_bounds = array<i64: 1, 128>}, {transform_indices = @transform_3, window_bounds = array<i64: 1, 16, 128>}, {transform_indices = @transform_4, window_bounds = array<i64: 1, 1, 128>}, {transform_indices = @transform_5, window_bounds = array<i64: 1, 1, 128>}]} {
    %c0 = arith.constant 0 : index
    %c0_0 = arith.constant 0 : index
    %c0_1 = arith.constant 0 : index
    %0 = vector.load %arg1[%c0, %c0_0, %c0_1] : memref<1x18x144xf32, #tpu.memory_space<vmem>>, vector<1x18x144xf32>
    %1 = vector.shape_cast %0 : vector<1x18x144xf32> to vector<18x144xf32>
    %2 = vector.extract_strided_slice %1 {offsets = [0, 0], sizes = [16, 144], strides = [1, 1]} : vector<18x144xf32> to vector<16x144xf32>
    %c0_2 = arith.constant 0 : index
    %c0_3 = arith.constant 0 : index
    %c0_4 = arith.constant 0 : index
    %3 = vector.load %arg2[%c0_2, %c0_3, %c0_4] : memref<3x144x128xf32, #tpu.memory_space<vmem>>, vector<1x144x128xf32>
    %4 = vector.shape_cast %3 : vector<1x144x128xf32> to vector<144x128xf32>
    %cst = arith.constant dense<0.000000e+00> : vector<16x128xf32>
    %5 = tpu.matmul %2, %4, %cst {dimension_numbers = #tpu.dot_dimension_numbers<[1], [0], [0], [1], [0, 0, 1, 1], [], []>} : vector<16x144xf32>, vector<144x128xf32>, vector<16x128xf32> -> vector<16x128xf32>
    %6 = vector.extract_strided_slice %1 {offsets = [1, 0], sizes = [16, 144], strides = [1, 1]} : vector<18x144xf32> to vector<16x144xf32>
    %c1 = arith.constant 1 : index
    %c0_5 = arith.constant 0 : index
    %c0_6 = arith.constant 0 : index
    %7 = vector.load %arg2[%c1, %c0_5, %c0_6] : memref<3x144x128xf32, #tpu.memory_space<vmem>>, vector<1x144x128xf32>
    %8 = vector.shape_cast %7 : vector<1x144x128xf32> to vector<144x128xf32>
    %cst_7 = arith.constant dense<0.000000e+00> : vector<16x128xf32>
    %9 = tpu.matmul %6, %8, %cst_7 {dimension_numbers = #tpu.dot_dimension_numbers<[1], [0], [0], [1], [0, 0, 1, 1], [], []>} : vector<16x144xf32>, vector<144x128xf32>, vector<16x128xf32> -> vector<16x128xf32>
    %10 = arith.addf %5, %9 : vector<16x128xf32>
    %11 = vector.extract_strided_slice %1 {offsets = [2, 0], sizes = [16, 144], strides = [1, 1]} : vector<18x144xf32> to vector<16x144xf32>
    %c2 = arith.constant 2 : index
    %c0_8 = arith.constant 0 : index
    %c0_9 = arith.constant 0 : index
    %12 = vector.load %arg2[%c2, %c0_8, %c0_9] : memref<3x144x128xf32, #tpu.memory_space<vmem>>, vector<1x144x128xf32>
    %13 = vector.shape_cast %12 : vector<1x144x128xf32> to vector<144x128xf32>
    %cst_10 = arith.constant dense<0.000000e+00> : vector<16x128xf32>
    %14 = tpu.matmul %11, %13, %cst_10 {dimension_numbers = #tpu.dot_dimension_numbers<[1], [0], [0], [1], [0, 0, 1, 1], [], []>} : vector<16x144xf32>, vector<144x128xf32>, vector<16x128xf32> -> vector<16x128xf32>
    %15 = arith.addf %10, %14 : vector<16x128xf32>
    %c0_11 = arith.constant 0 : index
    %c0_12 = arith.constant 0 : index
    %16 = vector.load %arg3[%c0_11, %c0_12] : memref<1x128xf32, #tpu.memory_space<vmem>>, vector<1x128xf32>
    %17 = vector.broadcast %16 : vector<1x128xf32> to vector<16x128xf32>
    %18 = arith.addf %15, %17 : vector<16x128xf32>
    %c0_13 = arith.constant 0 : index
    %c0_14 = arith.constant 0 : index
    %c0_15 = arith.constant 0 : index
    %19 = vector.load %arg4[%c0_13, %c0_14, %c0_15] : memref<1x16x128xf32, #tpu.memory_space<vmem>>, vector<1x16x128xf32>
    %20 = vector.shape_cast %19 : vector<1x16x128xf32> to vector<16x128xf32>
    %21 = vector.shape_cast %18 : vector<16x128xf32> to vector<1x16x128xf32>
    tpu.vector_store %arg4[%c0_13, %c0_14, %c0_15], %21 {strides = array<i32>} : memref<1x16x128xf32, #tpu.memory_space<vmem>>, vector<1x16x128xf32>,
    %cst_16 = arith.constant dense<0.000000e+00> : vector<128xf32>
    %22 = vector.multi_reduction <add>, %18, %cst_16 [0] : vector<16x128xf32> to vector<128xf32>
    %23 = vector.shape_cast %22 : vector<128xf32> to vector<1x128xf32>
    %c0_17 = arith.constant 0 : index
    %c0_18 = arith.constant 0 : index
    %c0_19 = arith.constant 0 : index
    %24 = vector.load %arg5[%c0_17, %c0_18, %c0_19] : memref<1x1x128xf32, #tpu.memory_space<vmem>>, vector<1x1x128xf32>
    %25 = vector.shape_cast %24 : vector<1x1x128xf32> to vector<1x128xf32>
    %26 = vector.shape_cast %23 : vector<1x128xf32> to vector<1x1x128xf32>
    tpu.vector_store %arg5[%c0_17, %c0_18, %c0_19], %26 {strides = array<i32>} : memref<1x1x128xf32, #tpu.memory_space<vmem>>, vector<1x1x128xf32>,
    %27 = arith.mulf %18, %18 : vector<16x128xf32>
    %cst_20 = arith.constant dense<0.000000e+00> : vector<128xf32>
    %28 = vector.multi_reduction <add>, %27, %cst_20 [0] : vector<16x128xf32> to vector<128xf32>
    %29 = vector.shape_cast %28 : vector<128xf32> to vector<1x128xf32>
    %c0_21 = arith.constant 0 : index
    %c0_22 = arith.constant 0 : index
    %c0_23 = arith.constant 0 : index
    %30 = vector.load %arg6[%c0_21, %c0_22, %c0_23] : memref<1x1x128xf32, #tpu.memory_space<vmem>>, vector<1x1x128xf32>
    %31 = vector.shape_cast %30 : vector<1x1x128xf32> to vector<1x128xf32>
    %32 = vector.shape_cast %29 : vector<1x128xf32> to vector<1x1x128xf32>
    tpu.vector_store %arg6[%c0_21, %c0_22, %c0_23], %32 {strides = array<i32>} : memref<1x1x128xf32, #tpu.memory_space<vmem>>, vector<1x1x128xf32>,
    return
  }
  func.func @transform_0(%arg0: i32) -> (i32, i32, i32) {
    %c0_i32 = arith.constant 0 : i32
    %c0_i32_0 = arith.constant 0 : i32
    %c0_i32_1 = arith.constant 0 : i32
    return %arg0, %c0_i32, %c0_i32_0 : i32, i32, i32
  }
  func.func @transform_1(%arg0: i32) -> (i32, i32, i32) {
    %c0_i32 = arith.constant 0 : i32
    %c0_i32_0 = arith.constant 0 : i32
    %c0_i32_1 = arith.constant 0 : i32
    %c0_i32_2 = arith.constant 0 : i32
    return %c0_i32, %c0_i32_0, %c0_i32_1 : i32, i32, i32
  }
  func.func @transform_2(%arg0: i32) -> (i32, i32) {
    %c0_i32 = arith.constant 0 : i32
    %c0_i32_0 = arith.constant 0 : i32
    %c0_i32_1 = arith.constant 0 : i32
    return %c0_i32, %c0_i32_0 : i32, i32
  }
  func.func @transform_3(%arg0: i32) -> (i32, i32, i32) {
    %c0_i32 = arith.constant 0 : i32
    %c0_i32_0 = arith.constant 0 : i32
    %c0_i32_1 = arith.constant 0 : i32
    return %arg0, %c0_i32, %c0_i32_0 : i32, i32, i32
  }
  func.func @transform_4(%arg0: i32) -> (i32, i32, i32) {
    %c0_i32 = arith.constant 0 : i32
    %c0_i32_0 = arith.constant 0 : i32
    %c0_i32_1 = arith.constant 0 : i32
    return %arg0, %c0_i32, %c0_i32_0 : i32, i32, i32
  }
  func.func @transform_5(%arg0: i32) -> (i32, i32, i32) {
    %c0_i32 = arith.constant 0 : i32
    %c0_i32_0 = arith.constant 0 : i32
    %c0_i32_1 = arith.constant 0 : i32
    return %arg0, %c0_i32, %c0_i32_0 : i32, i32, i32
  }
}

</mosaic_0001>

<llo_original>
// kernel: tile.33
$region0: #{tile.33}
  #allocation0 [shape = 's32[1]{0}', space=sflag, size = 0x4, scoped, tag = 'scoped memory for tile.33']
  %s0 = inlined_call_operand.vmem [shape: f32[8], index: 0, kind: input, shape index: {}]
  %s1 = inlined_call_operand.vmem [shape: f32[16,8], index: 1, kind: output, shape index: {}]
  // Predicated region
  $region2: #{tile.33} parent=0 // pred_check
    _
  $region3: #{tile.33} parent=0 // pred_check_branch
    %3 = sbr.rel (0) target = $region5
  $region4: #{tile.33} parent=0 // pred_region
    _
  $region5: #{tile.33} parent=0 // pred_fallthru
    _
  %v4 = vld [vmem:[%s0] ss:$0 sm:$0xff]
  %5 = vst [vmem:[%s1] sm:$0xff] %v4
  %s6 = scalar_lea.vmem %s1, 8
  %7 = vst [vmem:[%s6] sm:$0xff] %v4

// kernel: tile.34
$region0: #{tile.34}
  %s0 = inlined_call_operand.vmem [shape: f32[16,8], index: 0, kind: input, shape index: {}]
  %s1 = inlined_call_operand.vmem [shape: f32[1,128], index: 1, kind: output, shape index: {}]
  $region1: #{tile.34} parent=0
    #allocation0 [shape = 'u8[4096]{0}', space=vmem, size = 0x1000, scoped, tag = 'scoped mem for output reshape']
    %v2 = vld [vmem:[%s0] sm:$0x1]
    %vm3 = vcmask 64512
    %4 = vst.msk [vmem:[#allocation0] sm:$0x1] %vm3, %v2
    %s5 = scalar_lea.vmem %s0, 15
    %v6 = vld [vmem:[%s5] sm:$0x1]
    %7 = vrot.lane.b32.xlu0 %v6, 120
    %v8 = vpop.permute.xlu0 %7
    %vm9 = vcmask 1048512
    %10 = vst.msk [vmem:[#allocation0] sm:$0x1] %vm9, %v8
    %s11 = scalar_lea.vmem %s0, 14
    %v12 = vld [vmem:[%s11] sm:$0x1]
    %13 = vrot.lane.b32.xlu0 %v12, 112
    %v14 = vpop.permute.xlu0 %13
    %vm15 = vcmask 982912
    %16 = vst.msk [vmem:[#allocation0] sm:$0x1] %vm15, %v14
    %s17 = scalar_lea.vmem %s0, 13
    %v18 = vld [vmem:[%s17] sm:$0x1]
    %19 = vrot.lane.b32.xlu0 %v18, 104
    %v20 = vpop.permute.xlu0 %19
    %vm21 = vcmask 917312
    %22 = vst.msk [vmem:[#allocation0] sm:$0x1] %vm21, %v20
    %s23 = scalar_lea.vmem %s0, 12
    %v24 = vld [vmem:[%s23] sm:$0x1]
    %25 = vrot.lane.b32.xlu0 %v24, 96
    %v26 = vpop.permute.xlu0 %25
    %vm27 = vcmask 851712
    %28 = vst.msk [vmem:[#allocation0] sm:$0x1] %vm27, %v26
    %s29 = scalar_lea.vmem %s0, 11
    %v30 = vld [vmem:[%s29] sm:$0x1]
    %31 = vrot.lane.b32.xlu0 %v30, 88
    %v32 = vpop.permute.xlu0 %31
    %vm33 = vcmask 786112
    %34 = vst.msk [vmem:[#allocation0] sm:$0x1] %vm33, %v32
    %s35 = scalar_lea.vmem %s0, 10
    %v36 = vld [vmem:[%s35] sm:$0x1]
    %37 = vrot.lane.b32.xlu0 %v36, 80
    %v38 = vpop.permute.xlu0 %37
    %vm39 = vcmask 720512
    %40 = vst.msk [vmem:[#allocation0] sm:$0x1] %vm39, %v38
    %s41 = scalar_lea.vmem %s0, 9
    %v42 = vld [vmem:[%s41] sm:$0x1]
    %43 = vrot.lane.b32.xlu0 %v42, 72
    %v44 = vpop.permute.xlu0 %43
    %vm45 = vcmask 654912
    %46 = vst.msk [vmem:[#allocation0] sm:$0x1] %vm45, %v44
    %s47 = scalar_lea.vmem %s0, 8
    %v48 = vld [vmem:[%s47] sm:$0x1]
    %49 = vrot.lane.b32.xlu0 %v48, 64
    %v50 = vpop.permute.xlu0 %49
    %vm51 = vcmask 589312
    %52 = vst.msk [vmem:[#allocation0] sm:$0x1] %vm51, %v50
    %s53 = scalar_lea.vmem %s0, 7
    %v54 = vld [vmem:[%s53] sm:$0x1]
    %55 = vrot.lane.b32.xlu0 %v54, 56
    %v56 = vpop.permute.xlu0 %55
    %vm57 = vcmask 523712
    %58 = vst.msk [vmem:[#allocation0] sm:$0x1] %vm57, %v56
    %s59 = scalar_lea.vmem %s0, 6
    %v60 = vld [vmem:[%s59] sm:$0x1]
    %61 = vrot.lane.b32.xlu0 %v60, 48
    %v62 = vpop.permute.xlu0 %61
    %vm63 = vcmask 458112
    %64 = vst.msk [vmem:[#allocation0] sm:$0x1] %vm63, %v62
    %s65 = scalar_lea.vmem %s0, 5
    %v66 = vld [vmem:[%s65] sm:$0x1]
    %67 = vrot.lane.b32.xlu0 %v66, 40
    %v68 = vpop.permute.xlu0 %67
    %vm69 = vcmask 392512
    %70 = vst.msk [vmem:[#allocation0] sm:$0x1] %vm69, %v68
    %s71 = scalar_lea.vmem %s0, 4
    %v72 = vld [vmem:[%s71] sm:$0x1]
    %73 = vrot.lane.b32.xlu0 %v72, 32
    %v74 = vpop.permute.xlu0 %73
    %vm75 = vcmask 326912
    %76 = vst.msk [vmem:[#allocation0] sm:$0x1] %vm75, %v74
    %s77 = scalar_lea.vmem %s0, 3
    %v78 = vld [vmem:[%s77] sm:$0x1]
    %79 = vrot.lane.b32.xlu0 %v78, 24
    %v80 = vpop.permute.xlu0 %79
    %vm81 = vcmask 261312
    %82 = vst.msk [vmem:[#allocation0] sm:$0x1] %vm81, %v80
    %s83 = scalar_lea.vmem %s0, 2
    %v84 = vld [vmem:[%s83] sm:$0x1]
    %85 = vrot.lane.b32.xlu0 %v84, 16
    %v86 = vpop.permute.xlu0 %85
    %vm87 = vcmask 195712
    %88 = vst.msk [vmem:[#allocation0] sm:$0x1] %vm87, %v86
    %s89 = scalar_lea.vmem %s0, 1
    %v90 = vld [vmem:[%s89] sm:$0x1]
    %91 = vrot.lane.b32.xlu0 %v90, 8
    %v92 = vpop.permute.xlu0 %91
    %vm93 = vcmask 130112
    %94 = vst.msk [vmem:[#allocation0] sm:$0x1] %vm93, %v92
    %s96 = sshllo.u32 0, 1
    %v98 = vld [vmem:[#allocation0] sm:%s96]
    %s99 = sshllo.u32 0, 1
    %100 = vst [vmem:[%s1] sm:%s99] %v98

// kernel: double_conv.5
$region0: #{double_conv.5}
  #allocation0 [shape = 'u32[]', space=smem, size = 0x4, offset = 0x4, fixed_abs, tag = 'smem constant byte address 0x4 - core index']
  #allocation1 [shape = 'u32[144,128]{1,0:T(1,128)}', space=vmem, size = 0x12000, scoped, tag = 'internal scratch']
  %s0 = inlined_call_operand.vmem [shape: f32[32,128], index: 0, kind: input, shape index: {}]
  %s1 = inlined_call_operand.vmem [shape: f32[1,128], index: 1, kind: input, shape index: {}]
  %s2 = inlined_call_operand.vmem [shape: f32[1,128], index: 2, kind: input, shape index: {}]
  %s3 = inlined_call_operand.vmem [shape: f32[32,128], index: 3, kind: output, shape index: {}]
  %s4 = sld [smem:[#allocation0]]
  $region22: #{double_conv.5} parent=0
    _
  %s6 = ssub.s32 1, %s4
  %s7 = scalar_select 0, %s6, %s4
  // Predicated region
  $region2: #{double_conv.5} parent=0 // pred_check
    _
  $region3: #{double_conv.5} parent=0 // pred_check_branch
    %9 = sbr.rel (0) target = $region5
  $region4: #{double_conv.5} parent=0 // pred_region
    _
  $region5: #{double_conv.5} parent=0 // pred_fallthru
    _
  // Predicated region
  $region6: #{double_conv.5} parent=0 // pred_check
    _
  $region7: #{double_conv.5} parent=0 // pred_check_branch
    %11 = sbr.rel (0) target = $region9
  $region8: #{double_conv.5} parent=0 // pred_region
    _
  $region9: #{double_conv.5} parent=0 // pred_fallthru
    _
  // Predicated region
  $region10: #{double_conv.5} parent=0 // pred_check
    _
  $region11: #{double_conv.5} parent=0 // pred_check_branch
    %13 = sbr.rel (0) target = $region13
  $region12: #{double_conv.5} parent=0 // pred_region
    _
  $region13: #{double_conv.5} parent=0 // pred_fallthru
    _
  %v14 = vld [vmem:[%s0] sm:$0xff]
  %v15 = vld [vmem:[%s0 + $0x8] sm:$0xff]
  %v16 = vld [vmem:[%s0 + $0x10] sm:$0xff]
  %v17 = vld [vmem:[%s0 + $0x18] sm:$0xff]
  %v18 = vld [vmem:[%s1] sm:$0x1]
  %v20 = vlaneseq
  %v21 = vshrl.u32 %v20, 7
  %v22 = vsub.s32 0, %v21
  %v23 = vrot.slane %v18, %v22
  %v25 = vmul.f32 %v14, %v23
  %v26 = vmul.f32 %v15, %v23
  %v27 = vmul.f32 %v16, %v23
  %v28 = vmul.f32 %v17, %v23
  %v29 = vld [vmem:[%s2] sm:$0x1]
  %v31 = vlaneseq
  %v32 = vshrl.u32 %v31, 7
  %v33 = vsub.s32 0, %v32
  %v34 = vrot.slane %v29, %v33
  %v36 = vadd.f32 %v25, %v34
  %v37 = vadd.f32 %v26, %v34
  %v38 = vadd.f32 %v27, %v34
  %v39 = vadd.f32 %v28, %v34
  %v40 = vxor.u32 %v36, 2147483648
  %v41 = vxor.u32 %v37, 2147483648
  %v42 = vxor.u32 %v38, 2147483648
  %v43 = vxor.u32 %v39, 2147483648
  %v44 = vmul.f32 %v40, 1.442695
  %v45 = vpow.pop %v44
  %v46 = vmul.f32 %v41, 1.442695
  %v47 = vpow.pop %v46
  %v48 = vmul.f32 %v42, 1.442695
  %v49 = vpow.pop %v48
  %v50 = vmul.f32 %v43, 1.442695
  %v51 = vpow.pop %v50
  %v52 = vadd.f32 %v45, 1.0
  %v53 = vadd.f32 %v47, 1.0
  %v54 = vadd.f32 %v49, 1.0
  %v55 = vadd.f32 %v51, 1.0
  %v56 = vrcp.pop %v52
  %v57 = vmul.f32 1.0, %v56
  %v58 = vrcp.pop %v53
  %v59 = vmul.f32 1.0, %v58
  %v60 = vrcp.pop %v54
  %v61 = vmul.f32 1.0, %v60
  %v62 = vrcp.pop %v55
  %v63 = vmul.f32 1.0, %v62
  %v64 = vmul.f32 %v36, %v57
  %v65 = vmul.f32 %v37, %v59
  %v66 = vmul.f32 %v38, %v61
  %v67 = vmul.f32 %v39, %v63
  %68 = vst [vmem:[%s3] sm:$0xff] %v64
  %69 = vst [vmem:[%s3 + $0x8] sm:$0xff] %v65
  %70 = vst [vmem:[%s3 + $0x10] sm:$0xff] %v66
  %71 = vst [vmem:[%s3 + $0x18] sm:$0xff] %v67
  // Predicated region
  $region14: #{double_conv.5} parent=0 // pred_check
    _
  $region15: #{double_conv.5} parent=0 // pred_check_branch
    %73 = sbr.rel (0) target = $region17
  $region16: #{double_conv.5} parent=0 // pred_region
    _
  $region17: #{double_conv.5} parent=0 // pred_fallthru
    _
  // Predicated region
  $region18: #{double_conv.5} parent=0 // pred_check
    _
  $region19: #{double_conv.5} parent=0 // pred_check_branch
    %75 = sbr.rel (0) target = $region21
  $region20: #{double_conv.5} parent=0 // pred_region
    _
  $region21: #{double_conv.5} parent=0 // pred_fallthru
    _

// kernel: double_conv.4
$region0: #{double_conv.4}
  #allocation0 [shape = 'u32[]', space=smem, size = 0x4, offset = 0x4, fixed_abs, tag = 'smem constant byte address 0x4 - core index']
  #allocation1 [shape = 'u32[144,128]{1,0:T(1,128)}', space=vmem, size = 0x12000, scoped, tag = 'internal scratch']
  %s0 = inlined_call_operand.vmem [shape: f32[2,18,72], index: 0, kind: input, shape index: {}]
  %s1 = inlined_call_operand.vmem [shape: f32[3,72,128], index: 1, kind: input, shape index: {}]
  %s2 = inlined_call_operand.vmem [shape: f32[1,128], index: 2, kind: input, shape index: {}]
  %s3 = inlined_call_operand.vmem [shape: f32[2,16,128], index: 3, kind: output, shape index: {0}]
  %s4 = inlined_call_operand.vmem [shape: f32[2,1,128], index: 4, kind: output, shape index: {1}]
  %s5 = inlined_call_operand.vmem [shape: f32[2,1,128], index: 5, kind: output, shape index: {2}]
  %6 = xla_tuple %s3, %s4, %s5
  %s7 = sld [smem:[#allocation0]]
  $region61: #{double_conv.4} parent=0
    _
  %s9 = ssub.s32 1, %s7
  %s10 = scalar_select 0, %s9, %s7
  loop: start=0, step=1, limit=4
  $region2: #{double_conv.4} parent=0 // loop_pre_header
    _
  $region3: #{double_conv.4} parent=0 // loop_header
    %s12 = sphi 0, %s16
    %p13 = scmp.ge.s32.totalorder %s12, 4
    %s22 = sphi 0, %s24
    %s25 = sphi 0, %s22
    %s26 = sphi 0, %s25
    %s42 = sphi 0, %s26
    %s46 = sphi 0, %s46
    %s48 = sphi 0, %s46
    %s49 = sphi 0, %s48
    %s63 = sphi 0, %s49
    %s67 = sphi 0, %s67
    %s69 = sphi 0, %s67
    %s70 = sphi 0, %s69
    %s84 = sphi 0, %s70
    %s90 = sphi 0, %s92
    %s93 = sphi 0, %s90
    %s94 = sphi 0, %s93
    %s110 = sphi 0, %s94
    %s116 = sphi 0, %s118
    %s119 = sphi 0, %s116
    %s120 = sphi 0, %s119
    %s136 = sphi 0, %s120
    %s142 = sphi 0, %s144
    %s145 = sphi 0, %s142
    %s146 = sphi 0, %s145
    %s162 = sphi 0, %s146
  $region4: #{double_conv.4} parent=0 // loop_header_branch
    %15 = sbr.rel (%p13) target = $region8
  $region5: #{double_conv.4} parent=0 // loop_body
    %s17 = ssub.s32 %s12, 1
    %s18 = ssub.s32 %s12, 2
    %s19 = sadd.s32 %s12, 1
    %s20 = ssub.s32 %s12, %s19
    %p21 = scmp.eq.s32.totalorder %s20, 0
    %s23 = sadd.s32 %s22, 1
    %s24 = scalar_select %p21, %s22, %s23
    %p27 = pneg %p21
    %p28 = scmp.eq.s32.totalorder %s12, 1
    %p29 = por %p27, %p28
    %p30 = scmp.ne.s32.totalorder %s22, %s25
    %p31 = scmp.eq.s32.totalorder %s12, 0
    %p32 = por %p30, %p31
    %p33 = scmp.ne.s32.totalorder %s22, %s25
    %p34 = scmp.eq.s32.totalorder %s17, 1
    %p35 = por %p33, %p34
    %p36 = scmp.ne.s32.totalorder %s25, %s26
    %p37 = scmp.eq.s32.totalorder %s17, 0
    %p38 = por %p36, %p37
    %p39 = scmp.ne.s32.totalorder %s25, %s26
    %p40 = scmp.eq.s32.totalorder %s18, 1
    %p41 = por %p39, %p40
    %p43 = scmp.ne.s32.totalorder %s26, %s42
    %p44 = scmp.eq.s32.totalorder %s18, 0
    %p45 = por %p43, %p44
    %s47 = sadd.s32 %s46, 1
    %p50 = scmp.eq.s32.totalorder %s12, 1
    %p51 = scmp.ne.s32.totalorder %s46, %s48
    %p52 = scmp.eq.s32.totalorder %s12, 0
    %p53 = por %p51, %p52
    %p54 = scmp.ne.s32.totalorder %s46, %s48
    %p55 = scmp.eq.s32.totalorder %s17, 1
    %p56 = por %p54, %p55
    %p57 = scmp.ne.s32.totalorder %s48, %s49
    %p58 = scmp.eq.s32.totalorder %s17, 0
    %p59 = por %p57, %p58
    %p60 = scmp.ne.s32.totalorder %s48, %s49
    %p61 = scmp.eq.s32.totalorder %s18, 1
    %p62 = por %p60, %p61
    %p64 = scmp.ne.s32.totalorder %s49, %s63
    %p65 = scmp.eq.s32.totalorder %s18, 0
    %p66 = por %p64, %p65
    %s68 = sadd.s32 %s67, 1
    %p71 = scmp.eq.s32.totalorder %s12, 1
    %p72 = scmp.ne.s32.totalorder %s67, %s69
    %p73 = scmp.eq.s32.totalorder %s12, 0
    %p74 = por %p72, %p73
    %p75 = scmp.ne.s32.totalorder %s67, %s69
    %p76 = scmp.eq.s32.totalorder %s17, 1
    %p77 = por %p75, %p76
    %p78 = scmp.ne.s32.totalorder %s69, %s70
    %p79 = scmp.eq.s32.totalorder %s17, 0
    %p80 = por %p78, %p79
    %p81 = scmp.ne.s32.totalorder %s69, %s70
    %p82 = scmp.eq.s32.totalorder %s18, 1
    %p83 = por %p81, %p82
    %p85 = scmp.ne.s32.totalorder %s70, %s84
    %p86 = scmp.eq.s32.totalorder %s18, 0
    %p87 = por %p85, %p86
    %s88 = ssub.s32 %s12, %s19
    %p89 = scmp.eq.s32.totalorder %s88, 0
    %s91 = sadd.s32 %s90, 1
    %s92 = scalar_select %p89, %s90, %s91
    %p95 = pneg %p89
    %p96 = scmp.eq.s32.totalorder %s12, 1
    %p97 = por %p95, %p96
    %p98 = scmp.ne.s32.totalorder %s90, %s93
    %p99 = scmp.eq.s32.totalorder %s12, 0
    %p100 = por %p98, %p99
    %p101 = scmp.ne.s32.totalorder %s90, %s93
    %p102 = scmp.eq.s32.totalorder %s17, 1
    %p103 = por %p101, %p102
    %p104 = scmp.ne.s32.totalorder %s93, %s94
    %p105 = scmp.eq.s32.totalorder %s17, 0
    %p106 = por %p104, %p105
    %p107 = scmp.ne.s32.totalorder %s93, %s94
    %p108 = scmp.eq.s32.totalorder %s18, 1
    %p109 = por %p107, %p108
    %p111 = scmp.ne.s32.totalorder %s94, %s110
    %p112 = scmp.eq.s32.totalorder %s18, 0
    %p113 = por %p111, %p112
    %s114 = ssub.s32 %s12, %s19
    %p115 = scmp.eq.s32.totalorder %s114, 0
    %s117 = sadd.s32 %s116, 1
    %s118 = scalar_select %p115, %s116, %s117
    %p121 = pneg %p115
    %p122 = scmp.eq.s32.totalorder %s12, 1
    %p123 = por %p121, %p122
    %p124 = scmp.ne.s32.totalorder %s116, %s119
    %p125 = scmp.eq.s32.totalorder %s12, 0
    %p126 = por %p124, %p125
    %p127 = scmp.ne.s32.totalorder %s116, %s119
    %p128 = scmp.eq.s32.totalorder %s17, 1
    %p129 = por %p127, %p128
    %p130 = scmp.ne.s32.totalorder %s119, %s120
    %p131 = scmp.eq.s32.totalorder %s17, 0
    %p132 = por %p130, %p131
    %p133 = scmp.ne.s32.totalorder %s119, %s120
    %p134 = scmp.eq.s32.totalorder %s18, 1
    %p135 = por %p133, %p134
    %p137 = scmp.ne.s32.totalorder %s120, %s136
    %p138 = scmp.eq.s32.totalorder %s18, 0
    %p139 = por %p137, %p138
    %s140 = ssub.s32 %s12, %s19
    %p141 = scmp.eq.s32.totalorder %s140, 0
    %s143 = sadd.s32 %s142, 1
    %s144 = scalar_select %p141, %s142, %s143
    %p147 = pneg %p141
    %p148 = scmp.eq.s32.totalorder %s12, 1
    %p149 = por %p147, %p148
    %p150 = scmp.ne.s32.totalorder %s142, %s145
    %p151 = scmp.eq.s32.totalorder %s12, 0
    %p152 = por %p150, %p151
    %p153 = scmp.ne.s32.totalorder %s142, %s145
    %p154 = scmp.eq.s32.totalorder %s17, 1
    %p155 = por %p153, %p154
    %p156 = scmp.ne.s32.totalorder %s145, %s146
    %p157 = scmp.eq.s32.totalorder %s17, 0
    %p158 = por %p156, %p157
    %p159 = scmp.ne.s32.totalorder %s145, %s146
    %p160 = scmp.eq.s32.totalorder %s18, 1
    %p161 = por %p159, %p160
    %p163 = scmp.ne.s32.totalorder %s146, %s162
    %p164 = scmp.eq.s32.totalorder %s18, 0
    %p165 = por %p163, %p164
    %p166 = scmp.le.s32.totalorder 1, %s12
    %p167 = scmp.lt.s32.totalorder %s12, 3
    %p168 = pnand %p166, %p167
    %p169 = pneg %p168
    // Predicated region
    $region9: #{double_conv.4} parent=5 // pred_check
      _
    $region10: #{double_conv.4} parent=5 // pred_check_branch
      %171 = sbr.rel (%p168) target = $region12
    $region11: #{double_conv.4} parent=5 // pred_region
      %s172 = ssub.s32 %s12, 1
      // Predicated region
      $region13: #{double_conv.4} parent=11 // pred_check
        %p173 = pneg %p59
      $region14: #{double_conv.4} parent=11 // pred_check_branch
        %175 = sbr.rel (%p173) target = $region16
      $region15: #{double_conv.4} parent=11 // pred_region
        _
      $region16: #{double_conv.4} parent=11 // pred_fallthru
        _
      // Predicated region
      $region17: #{double_conv.4} parent=11 // pred_check
        %p176 = pneg %p80
      $region18: #{double_conv.4} parent=11 // pred_check_branch
        %178 = sbr.rel (%p176) target = $region20
      $region19: #{double_conv.4} parent=11 // pred_region
        _
      $region20: #{double_conv.4} parent=11 // pred_fallthru
        _
    $region12: #{double_conv.4} parent=5 // pred_fallthru
      _
    %p179 = scmp.lt.s32.totalorder %s12, 2
    // Predicated region
    $region21: #{double_conv.4} parent=5 // pred_check
      %p180 = pneg %p179
    $region22: #{double_conv.4} parent=5 // pred_check_branch
      %182 = sbr.rel (%p180) target = $region24
    $region23: #{double_conv.4} parent=5 // pred_region
      // Predicated region
      $region25: #{double_conv.4} parent=23 // pred_check
        %p183 = pneg %p32
      $region26: #{double_conv.4} parent=23 // pred_check_branch
        %185 = sbr.rel (%p183) target = $region28
      $region27: #{double_conv.4} parent=23 // pred_region
        %p186 = scmp.lt.s32.totalorder %s12, 1
        %s187 = scalar_select %p186, %s12, 1
        %s188 = smul.addr %s187, 3
        %s189 = smul.addr %s188, 8
        %s190 = scalar_lea.vmem %s0, %s189
      $region28: #{double_conv.4} parent=23 // pred_fallthru
        _
    $region24: #{double_conv.4} parent=5 // pred_fallthru
      _
    %p191 = scmp.le.s32.totalorder 1, %s12
    %p192 = scmp.lt.s32.totalorder %s12, 3
    %p193 = pnand %p191, %p192
    %p194 = pneg %p193
    // Predicated region
    $region29: #{double_conv.4} parent=5 // pred_check
      _
    $region30: #{double_conv.4} parent=5 // pred_check_branch
      %196 = sbr.rel (%p193) target = $region32
    $region31: #{double_conv.4} parent=5 // pred_region
      %s197 = ssub.s32 %s12, 1
      %p198 = scmp.lt.s32.totalorder %s17, 1
      %s199 = scalar_select %p198, %s17, 1
      %s200 = smul.addr %s199, 3
      %s201 = smul.addr %s200, 8
      %s202 = scalar_lea.vmem %s0, %s201
      %p203 = pneg %p38
      %p204 = pneg %p35
      %p205 = pneg %p59
      %p206 = pneg %p56
      %p207 = pneg %p80
      %p208 = pneg %p77
      %p209 = pneg %p106
      %p210 = pneg %p103
      %p211 = scmp.lt.s32.totalorder %s17, 1
      %s212 = scalar_select %p211, %s17, 1
      %s213 = smul.addr %s212, 2
      %s214 = smul.addr %s213, 8
      %s215 = scalar_lea.vmem %s3, %s214
      %p216 = pneg %p132
      %p217 = pneg %p129
      %p218 = scmp.lt.s32.totalorder %s17, 1
      %s219 = scalar_select %p218, %s17, 1
      %s220 = scalar_lea.vmem %s4, %s219
      %p221 = pneg %p158
      %p222 = pneg %p155
      %p223 = scmp.lt.s32.totalorder %s17, 1
      %s224 = scalar_select %p223, %s17, 1
      %s225 = scalar_lea.vmem %s5, %s224
      %p226 = scmp.lt.s32.totalorder %s17, 1
      %s227 = scalar_select %p226, %s17, 1
      %s228 = smul.addr %s227, 3
      %s229 = smul.addr %s228, 8
      %s230 = scalar_lea.vmem %s0, %s229
      %p231 = scmp.lt.s32.totalorder %s17, 1
      %s232 = scalar_select %p231, %s17, 1
      %s233 = smul.addr %s232, 2
      %s234 = smul.addr %s233, 8
      %s235 = scalar_lea.vmem %s3, %s234
      %p236 = scmp.lt.s32.totalorder %s17, 1
      %s237 = scalar_select %p236, %s17, 1
      %s238 = scalar_lea.vmem %s4, %s237
      %p239 = scmp.lt.s32.totalorder %s17, 1
      %s240 = scalar_select %p239, %s17, 1
      %s241 = scalar_lea.vmem %s5, %s240
      %v242 = vld [vmem:[%s230] sm:$0xff]
      %v243 = vld [vmem:[%s230 + $0x8] sm:$0xff]
      %v244 = vld [vmem:[%s230 + $0x10] sm:$0x3]
      %v245 = vld [vmem:[%s1] sm:$0xff]
      %v246 = vld [vmem:[%s1 + $0x8] sm:$0xff]
      %v247 = vld [vmem:[%s1 + $0x10] sm:$0xff]
      %v248 = vld [vmem:[%s1 + $0x18] sm:$0xff]
      %v249 = vld [vmem:[%s1 + $0x20] sm:$0xff]
      %v250 = vld [vmem:[%s1 + $0x28] sm:$0xff]
      %v251 = vld [vmem:[%s1 + $0x30] sm:$0xff]
      %v252 = vld [vmem:[%s1 + $0x38] sm:$0xff]
      %v253 = vld [vmem:[%s1 + $0x40] sm:$0xff]
      %s254 = scalar_lea.vmem %s1, 72
      %v255 = vld [vmem:[%s254] sm:$0xff]
      %v256 = vld [vmem:[%s254 + $0x8] sm:$0xff]
      %v257 = vld [vmem:[%s254 + $0x10] sm:$0xff]
      %v258 = vld [vmem:[%s254 + $0x18] sm:$0xff]
      %v259 = vld [vmem:[%s254 + $0x20] sm:$0xff]
      %v260 = vld [vmem:[%s254 + $0x28] sm:$0xff]
      %v261 = vld [vmem:[%s254 + $0x30] sm:$0xff]
      %v262 = vld [vmem:[%s254 + $0x38] sm:$0xff]
      %v263 = vld [vmem:[%s254 + $0x40] sm:$0xff]
      %vm267 = vcmask 1046528
      %v268 = vrot.slane %v242, 1
      %v269 = vrot.slane %v243, 1
      %v270 = vsel %vm267, %v268, %v269
      %v271 = vrot.slane %v244, 1
      %v272 = vsel %vm267, %v269, %v271
      %vm273 = vcmask 588800
      %v274 = vsel %vm273, %v270, 0
      %v276 = vsel %vm273, %v272, 0
      %278 = vmatprep.subr.mxu0 0.0
      %279 = vmatpush1.msra.mxu0 %v255
      %280 = vmatprep.subr.mxu0 0.0
      %281 = vmatpush1.msra.mxu0 %v256
      %282 = vmatprep.subr.mxu0 0.0
      %283 = vmatpush1.msra.mxu0 %v257
      %284 = vmatprep.subr.mxu0 0.0
      %285 = vmatpush1.msra.mxu0 %v258
      %286 = vmatprep.subr.mxu0 0.0
      %287 = vmatpush1.msra.mxu0 %v259
      %288 = vmatprep.subr.mxu0 0.0
      %289 = vmatpush1.msra.mxu0 %v260
      %290 = vmatprep.subr.mxu0 0.0
      %291 = vmatpush1.msra.mxu0 %v261
      %292 = vmatprep.subr.mxu0 0.0
      %293 = vmatpush1.msra.mxu0 %v262
      %294 = vmatprep.subr.mxu0 0.0
      %295 = vmatpush1.msra.mxu0 %v263
      %296 = vmatprep.subr.mxu0 0.0
      %297 = vmatpush1.msra.mxu0 0.0
      %298 = vmatprep.subr.mxu0 0.0
      %299 = vmatpush1.msra.mxu0 0.0
      %300 = vmatprep.subr.mxu0 0.0
      %301 = vmatpush1.msra.mxu0 0.0
      %302 = vmatprep.subr.mxu0 0.0
      %303 = vmatpush1.msra.mxu0 0.0
      %304 = vmatprep.subr.mxu0 0.0
      %305 = vmatpush1.msra.mxu0 0.0
      %306 = vmatprep.subr.mxu0 0.0
      %307 = vmatpush1.msra.mxu0 0.0
      %308 = vmatprep.subr.mxu0 0.0
      %309 = vmatpush1.msra.mxu0 0.0
      %310 = vmatprep.subr.mxu0 0.0
      %311 = vmatpush1.msra.mxu0 0.0
      %312 = vmatprep.subr.mxu0 0.0
      %313 = vmatpush1.msra.mxu0 0.0
      %314 = vmatprep.subr.mxu0 0.0
      %315 = vmatpush1.msra.mxu0 0.0
      %316 = vmatprep.subr.mxu0 0.0
      %317 = vmatpush1.msra.mxu0 0.0
      %318 = vmatprep.subr.mxu0 0.0
      %319 = vmatpush1.msra.mxu0 0.0
      %320 = vmatprep.subr.mxu0 0.0
      %321 = vmatpush1.msra.mxu0 0.0
      %322 = vmatprep.subr.mxu0 0.0
      %323 = vmatpush1.msra.mxu0 0.0
      %324 = vmatprep.subr.mxu0 0.0
      %325 = vmatpush1.msra.mxu0 0.0
      %326 = vmatprep.subr.mxu0 0.0
      %327 = vmatpush1.msra.mxu0 0.0
      %328 = vmatprep.subr.mxu0 0.0
      %329 = vmatpush1.msra.mxu0 0.0
      %330 = vmatprep.subr.mxu0 0.0
      %331 = vmatpush1.msra.mxu0 0.0
      %332 = vmatprep.subr.mxu0 0.0
      %333 = vmatpush1.msra.mxu0 0.0
      %334 = vmatprep.subr.mxu0 0.0
      %335 = vmatpush1.msra.mxu0 0.0
      %336 = vmatprep.subr.mxu0 0.0
      %337 = vmatpush1.msra.mxu0 0.0
      %338 = vmatprep.subr.mxu0 0.0
      %339 = vmatpush1.msra.mxu0 0.0
      %340 = vmatprep.subr.mxu0 0.0
      %341 = vmatpush1.msra.mxu0 0.0
      %342 = vmatprep.mubr.f32.mxu0 0.0
      %343 = vmatmul.mubr.f32.gmra.mrb[0].mxu0 %v274
      %v344 = vpop.f32.mrb[0].mxu0
      %v345 = vadd.f32 0.0, %v344
      %v346 = vpop.f32.mrb[0].mxu0
      %347 = vmatprep.mubr.f32.mxu0 0.0
      %348 = vmatmul.mubr.f32.gmra.mrb[0].mxu0 %v276
      %v349 = vpop.f32.mrb[0].mxu0
      %v350 = vadd.f32 0.0, %v349
      %v351 = vpop.f32.mrb[0].mxu0
      %352 = vdwg.mxu0
      %v353 = vsel %vm273, %v242, 0
      %v355 = vsel %vm273, %v243, 0
      %357 = vmatprep.subr.mxu0 0.0
      %358 = vmatpush1.msra.mxu0 %v245
      %359 = vmatprep.subr.mxu0 0.0
      %360 = vmatpush1.msra.mxu0 %v246
      %361 = vmatprep.subr.mxu0 0.0
      %362 = vmatpush1.msra.mxu0 %v247
      %363 = vmatprep.subr.mxu0 0.0
      %364 = vmatpush1.msra.mxu0 %v248
      %365 = vmatprep.subr.mxu0 0.0
      %366 = vmatpush1.msra.mxu0 %v249
      %367 = vmatprep.subr.mxu0 0.0
      %368 = vmatpush1.msra.mxu0 %v250
      %369 = vmatprep.subr.mxu0 0.0
      %370 = vmatpush1.msra.mxu0 %v251
      %371 = vmatprep.subr.mxu0 0.0
      %372 = vmatpush1.msra.mxu0 %v252
      %373 = vmatprep.subr.mxu0 0.0
      %374 = vmatpush1.msra.mxu0 %v253
      %375 = vmatprep.subr.mxu0 0.0
      %376 = vmatpush1.msra.mxu0 0.0
      %377 = vmatprep.subr.mxu0 0.0
      %378 = vmatpush1.msra.mxu0 0.0
      %379 = vmatprep.subr.mxu0 0.0
      %380 = vmatpush1.msra.mxu0 0.0
      %381 = vmatprep.subr.mxu0 0.0
      %382 = vmatpush1.msra.mxu0 0.0
      %383 = vmatprep.subr.mxu0 0.0
      %384 = vmatpush1.msra.mxu0 0.0
      %385 = vmatprep.subr.mxu0 0.0
      %386 = vmatpush1.msra.mxu0 0.0
      %387 = vmatprep.subr.mxu0 0.0
      %388 = vmatpush1.msra.mxu0 0.0
      %389 = vmatprep.subr.mxu0 0.0
      %390 = vmatpush1.msra.mxu0 0.0
      %391 = vmatprep.subr.mxu0 0.0
      %392 = vmatpush1.msra.mxu0 0.0
      %393 = vmatprep.subr.mxu0 0.0
      %394 = vmatpush1.msra.mxu0 0.0
      %395 = vmatprep.subr.mxu0 0.0
      %396 = vmatpush1.msra.mxu0 0.0
      %397 = vmatprep.subr.mxu0 0.0
      %398 = vmatpush1.msra.mxu0 0.0
      %399 = vmatprep.subr.mxu0 0.0
      %400 = vmatpush1.msra.mxu0 0.0
      %401 = vmatprep.subr.mxu0 0.0
      %402 = vmatpush1.msra.mxu0 0.0
      %403 = vmatprep.subr.mxu0 0.0
      %404 = vmatpush1.msra.mxu0 0.0
      %405 = vmatprep.subr.mxu0 0.0
      %406 = vmatpush1.msra.mxu0 0.0
      %407 = vmatprep.subr.mxu0 0.0
      %408 = vmatpush1.msra.mxu0 0.0
      %409 = vmatprep.subr.mxu0 0.0
      %410 = vmatpush1.msra.mxu0 0.0
      %411 = vmatprep.subr.mxu0 0.0
      %412 = vmatpush1.msra.mxu0 0.0
      %413 = vmatprep.subr.mxu0 0.0
      %414 = vmatpush1.msra.mxu0 0.0
      %415 = vmatprep.subr.mxu0 0.0
      %416 = vmatpush1.msra.mxu0 0.0
      %417 = vmatprep.subr.mxu0 0.0
      %418 = vmatpush1.msra.mxu0 0.0
      %419 = vmatprep.subr.mxu0 0.0
      %420 = vmatpush1.msra.mxu0 0.0
      %421 = vmatprep.mubr.f32.mxu0 0.0
      %422 = vmatmul.mubr.f32.gmra.mrb[0].mxu0 %v353
      %v423 = vpop.f32.mrb[0].mxu0
      %v424 = vadd.f32 %v345, %v423
      %v425 = vpop.f32.mrb[0].mxu0
      %426 = vmatprep.mubr.f32.mxu0 0.0
      %427 = vmatmul.mubr.f32.gmra.mrb[0].mxu0 %v355
      %v428 = vpop.f32.mrb[0].mxu0
      %v429 = vadd.f32 %v350, %v428
      %v430 = vpop.f32.mrb[0].mxu0
      %431 = vdwg.mxu0
      %s432 = scalar_lea.vmem %s1, 144
      %v433 = vld [vmem:[%s432] sm:$0xff]
      %v434 = vld [vmem:[%s432 + $0x8] sm:$0xff]
      %v435 = vld [vmem:[%s432 + $0x10] sm:$0xff]
      %v436 = vld [vmem:[%s432 + $0x18] sm:$0xff]
      %v437 = vld [vmem:[%s432 + $0x20] sm:$0xff]
      %v438 = vld [vmem:[%s432 + $0x28] sm:$0xff]
      %v439 = vld [vmem:[%s432 + $0x30] sm:$0xff]
      %v440 = vld [vmem:[%s432 + $0x38] sm:$0xff]
      %v441 = vld [vmem:[%s432 + $0x40] sm:$0xff]
      %vm442 = vcmask 1045504
      %v443 = vrot.slane %v242, 2
      %v444 = vrot.slane %v243, 2
      %v445 = vsel %vm442, %v443, %v444
      %v446 = vrot.slane %v244, 2
      %v447 = vsel %vm442, %v444, %v446
      %v448 = vsel %vm273, %v445, 0
      %v450 = vsel %vm273, %v447, 0
      %452 = vmatprep.subr.mxu0 0.0
      %453 = vmatpush1.msra.mxu0 %v433
      %454 = vmatprep.subr.mxu0 0.0
      %455 = vmatpush1.msra.mxu0 %v434
      %456 = vmatprep.subr.mxu0 0.0
      %457 = vmatpush1.msra.mxu0 %v435
      %458 = vmatprep.subr.mxu0 0.0
      %459 = vmatpush1.msra.mxu0 %v436
      %460 = vmatprep.subr.mxu0 0.0
      %461 = vmatpush1.msra.mxu0 %v437
      %462 = vmatprep.subr.mxu0 0.0
      %463 = vmatpush1.msra.mxu0 %v438
      %464 = vmatprep.subr.mxu0 0.0
      %465 = vmatpush1.msra.mxu0 %v439
      %466 = vmatprep.subr.mxu0 0.0
      %467 = vmatpush1.msra.mxu0 %v440
      %468 = vmatprep.subr.mxu0 0.0
      %469 = vmatpush1.msra.mxu0 %v441
      %470 = vmatprep.subr.mxu0 0.0
      %471 = vmatpush1.msra.mxu0 0.0
      %472 = vmatprep.subr.mxu0 0.0
      %473 = vmatpush1.msra.mxu0 0.0
      %474 = vmatprep.subr.mxu0 0.0
      %475 = vmatpush1.msra.mxu0 0.0
      %476 = vmatprep.subr.mxu0 0.0
      %477 = vmatpush1.msra.mxu0 0.0
      %478 = vmatprep.subr.mxu0 0.0
      %479 = vmatpush1.msra.mxu0 0.0
      %480 = vmatprep.subr.mxu0 0.0
      %481 = vmatpush1.msra.mxu0 0.0
      %482 = vmatprep.subr.mxu0 0.0
      %483 = vmatpush1.msra.mxu0 0.0
      %484 = vmatprep.subr.mxu0 0.0
      %485 = vmatpush1.msra.mxu0 0.0
      %486 = vmatprep.subr.mxu0 0.0
      %487 = vmatpush1.msra.mxu0 0.0
      %488 = vmatprep.subr.mxu0 0.0
      %489 = vmatpush1.msra.mxu0 0.0
      %490 = vmatprep.subr.mxu0 0.0
      %491 = vmatpush1.msra.mxu0 0.0
      %492 = vmatprep.subr.mxu0 0.0
      %493 = vmatpush1.msra.mxu0 0.0
      %494 = vmatprep.subr.mxu0 0.0
      %495 = vmatpush1.msra.mxu0 0.0
      %496 = vmatprep.subr.mxu0 0.0
      %497 = vmatpush1.msra.mxu0 0.0
      %498 = vmatprep.subr.mxu0 0.0
      %499 = vmatpush1.msra.mxu0 0.0
      %500 = vmatprep.subr.mxu0 0.0
      %501 = vmatpush1.msra.mxu0 0.0
      %502 = vmatprep.subr.mxu0 0.0
      %503 = vmatpush1.msra.mxu0 0.0
      %504 = vmatprep.subr.mxu0 0.0
      %505 = vmatpush1.msra.mxu0 0.0
      %506 = vmatprep.subr.mxu0 0.0
      %507 = vmatpush1.msra.mxu0 0.0
      %508 = vmatprep.subr.mxu0 0.0
      %509 = vmatpush1.msra.mxu0 0.0
      %510 = vmatprep.subr.mxu0 0.0
      %511 = vmatpush1.msra.mxu0 0.0
      %512 = vmatprep.subr.mxu0 0.0
      %513 = vmatpush1.msra.mxu0 0.0
      %514 = vmatprep.subr.mxu0 0.0
      %515 = vmatpush1.msra.mxu0 0.0
      %516 = vmatprep.mubr.f32.mxu0 0.0
      %517 = vmatmul.mubr.f32.gmra.mrb[0].mxu0 %v448
      %v518 = vpop.f32.mrb[0].mxu0
      %v519 = vadd.f32 0.0, %v518
      %v520 = vpop.f32.mrb[0].mxu0
      %521 = vmatprep.mubr.f32.mxu0 0.0
      %522 = vmatmul.mubr.f32.gmra.mrb[0].mxu0 %v450
      %v523 = vpop.f32.mrb[0].mxu0
      %v524 = vadd.f32 0.0, %v523
      %v525 = vpop.f32.mrb[0].mxu0
      %526 = vdwg.mxu0
      %v527 = vadd.f32 %v424, %v519
      %v528 = vadd.f32 %v429, %v524
      %v529 = vld [vmem:[%s2] sm:$0x1]
      %v531 = vlaneseq
      %v532 = vshrl.u32 %v531, 7
      %v533 = vsub.s32 0, %v532
      %v534 = vrot.slane %v529, %v533
      %v536 = vadd.f32 %v527, %v534
      %v537 = vadd.f32 %v528, %v534
      %538 = vst [vmem:[%s235] sm:$0xff] %v536
      %539 = vst [vmem:[%s235 + $0x8] sm:$0xff] %v537
      %v540 = vadd.f32 %v536, %v537
      %v541 = vrot.slane %v540, 4
      %v542 = vadd.f32 %v540, %v541
      %v543 = vrot.slane %v542, 2
      %v544 = vadd.f32 %v542, %v543
      %v545 = vrot.slane %v544, 1
      %v546 = vadd.f32 %v544, %v545
      %547 = vst [vmem:[%s238] sm:$0x1] %v546
      %v548 = vmul.f32 %v536, %v536
      %v549 = vmul.f32 %v537, %v537
      %v550 = vadd.f32 %v548, %v549
      %v551 = vrot.slane %v550, 4
      %v552 = vadd.f32 %v550, %v551
      %v553 = vrot.slane %v552, 2
      %v554 = vadd.f32 %v552, %v553
      %v555 = vrot.slane %v554, 1
      %v556 = vadd.f32 %v554, %v555
      %557 = vst [vmem:[%s241] sm:$0x1] %v556
      %p558 = scmp.lt.s32.totalorder %s17, 1
      %s559 = scalar_select %p558, %s17, 1
      %s560 = smul.addr %s559, 2
      %s561 = smul.addr %s560, 8
      %s562 = scalar_lea.vmem %s3, %s561
      %p563 = scmp.lt.s32.totalorder %s17, 1
      %s564 = scalar_select %p563, %s17, 1
      %s565 = scalar_lea.vmem %s4, %s564
      %p566 = scmp.lt.s32.totalorder %s17, 1
      %s567 = scalar_select %p566, %s17, 1
      %s568 = scalar_lea.vmem %s5, %s567
      // Predicated region
      $region33: #{double_conv.4} parent=31 // pred_check
        %p569 = pneg %p103
      $region34: #{double_conv.4} parent=31 // pred_check_branch
        %571 = sbr.rel (%p569) target = $region36
      $region35: #{double_conv.4} parent=31 // pred_region
        _
      $region36: #{double_conv.4} parent=31 // pred_fallthru
        _
      // Predicated region
      $region37: #{double_conv.4} parent=31 // pred_check
        %p572 = pneg %p129
      $region38: #{double_conv.4} parent=31 // pred_check_branch
        %574 = sbr.rel (%p572) target = $region40
      $region39: #{double_conv.4} parent=31 // pred_region
        _
      $region40: #{double_conv.4} parent=31 // pred_fallthru
        _
      // Predicated region
      $region41: #{double_conv.4} parent=31 // pred_check
        %p575 = pneg %p155
      $region42: #{double_conv.4} parent=31 // pred_check_branch
        %577 = sbr.rel (%p575) target = $region44
      $region43: #{double_conv.4} parent=31 // pred_region
        _
      $region44: #{double_conv.4} parent=31 // pred_fallthru
        _
    $region32: #{double_conv.4} parent=5 // pred_fallthru
      _
    %p578 = scmp.le.s32.totalorder 2, %s12
    // Predicated region
    $region45: #{double_conv.4} parent=5 // pred_check
      %p579 = pneg %p578
    $region46: #{double_conv.4} parent=5 // pred_check_branch
      %581 = sbr.rel (%p579) target = $region48
    $region47: #{double_conv.4} parent=5 // pred_region
      %s582 = ssub.s32 %s12, 2
      // Predicated region
      $region49: #{double_conv.4} parent=47 // pred_check
        %p583 = pneg %p109
      $region50: #{double_conv.4} parent=47 // pred_check_branch
        %585 = sbr.rel (%p583) target = $region52
      $region51: #{double_conv.4} parent=47 // pred_region
        %p586 = scmp.lt.s32.totalorder %s18, 1
        %s587 = scalar_select %p586, %s18, 1
        %s588 = smul.addr %s587, 2
        %s589 = smul.addr %s588, 8
        %s590 = scalar_lea.vmem %s3, %s589
      $region52: #{double_conv.4} parent=47 // pred_fallthru
        _
      // Predicated region
      $region53: #{double_conv.4} parent=47 // pred_check
        %p591 = pneg %p135
      $region54: #{double_conv.4} parent=47 // pred_check_branch
        %593 = sbr.rel (%p591) target = $region56
      $region55: #{double_conv.4} parent=47 // pred_region
        %p594 = scmp.lt.s32.totalorder %s18, 1
        %s595 = scalar_select %p594, %s18, 1
        %s596 = scalar_lea.vmem %s4, %s595
      $region56: #{double_conv.4} parent=47 // pred_fallthru
        _
      // Predicated region
      $region57: #{double_conv.4} parent=47 // pred_check
        %p597 = pneg %p161
      $region58: #{double_conv.4} parent=47 // pred_check_branch
        %599 = sbr.rel (%p597) target = $region60
      $region59: #{double_conv.4} parent=47 // pred_region
        %p600 = scmp.lt.s32.totalorder %s18, 1
        %s601 = scalar_select %p600, %s18, 1
        %s602 = scalar_lea.vmem %s5, %s601
      $region60: #{double_conv.4} parent=47 // pred_fallthru
        _
    $region48: #{double_conv.4} parent=5 // pred_fallthru
      _
  $region6: #{double_conv.4} parent=0 // loop_footer
    %s16 = sadd.s32 1, %s12
  $region7: #{double_conv.4} parent=0 // loop_footer_branch
    %11 = sbr.rel target = $region3
  $region8: #{double_conv.4} parent=0 // loop_exit
    _

// kernel: double_conv.6
$region0: #{double_conv.6}
  #allocation0 [shape = 'u32[]', space=smem, size = 0x4, offset = 0x4, fixed_abs, tag = 'smem constant byte address 0x4 - core index']
  #allocation1 [shape = 'u32[144,128]{1,0:T(1,128)}', space=vmem, size = 0x12000, scoped, tag = 'internal scratch']
  %s0 = inlined_call_operand.vmem [shape: f32[2,18,144], index: 0, kind: input, shape index: {}]
  %s1 = inlined_call_operand.vmem [shape: f32[3,144,128], index: 1, kind: input, shape index: {}]
  %s2 = inlined_call_operand.vmem [shape: f32[1,128], index: 2, kind: input, shape index: {}]
  %s3 = inlined_call_operand.vmem [shape: f32[2,16,128], index: 3, kind: output, shape index: {0}]
  %s4 = inlined_call_operand.vmem [shape: f32[2,1,128], index: 4, kind: output, shape index: {1}]
  %s5 = inlined_call_operand.vmem [shape: f32[2,1,128], index: 5, kind: output, shape index: {2}]
  %6 = xla_tuple %s3, %s4, %s5
  %s7 = sld [smem:[#allocation0]]
  $region61: #{double_conv.6} parent=0
    _
  %s9 = ssub.s32 1, %s7
  %s10 = scalar_select 0, %s9, %s7
  loop: start=0, step=1, limit=4
  $region2: #{double_conv.6} parent=0 // loop_pre_header
    _
  $region3: #{double_conv.6} parent=0 // loop_header
    %s12 = sphi 0, %s16
    %p13 = scmp.ge.s32.totalorder %s12, 4
    %s22 = sphi 0, %s24
    %s25 = sphi 0, %s22
    %s26 = sphi 0, %s25
    %s42 = sphi 0, %s26
    %s46 = sphi 0, %s46
    %s48 = sphi 0, %s46
    %s49 = sphi 0, %s48
    %s63 = sphi 0, %s49
    %s67 = sphi 0, %s67
    %s69 = sphi 0, %s67
    %s70 = sphi 0, %s69
    %s84 = sphi 0, %s70
    %s90 = sphi 0, %s92
    %s93 = sphi 0, %s90
    %s94 = sphi 0, %s93
    %s110 = sphi 0, %s94
    %s116 = sphi 0, %s118
    %s119 = sphi 0, %s116
    %s120 = sphi 0, %s119
    %s136 = sphi 0, %s120
    %s142 = sphi 0, %s144
    %s145 = sphi 0, %s142
    %s146 = sphi 0, %s145
    %s162 = sphi 0, %s146
  $region4: #{double_conv.6} parent=0 // loop_header_branch
    %15 = sbr.rel (%p13) target = $region8
  $region5: #{double_conv.6} parent=0 // loop_body
    %s17 = ssub.s32 %s12, 1
    %s18 = ssub.s32 %s12, 2
    %s19 = sadd.s32 %s12, 1
    %s20 = ssub.s32 %s12, %s19
    %p21 = scmp.eq.s32.totalorder %s20, 0
    %s23 = sadd.s32 %s22, 1
    %s24 = scalar_select %p21, %s22, %s23
    %p27 = pneg %p21
    %p28 = scmp.eq.s32.totalorder %s12, 1
    %p29 = por %p27, %p28
    %p30 = scmp.ne.s32.totalorder %s22, %s25
    %p31 = scmp.eq.s32.totalorder %s12, 0
    %p32 = por %p30, %p31
    %p33 = scmp.ne.s32.totalorder %s22, %s25
    %p34 = scmp.eq.s32.totalorder %s17, 1
    %p35 = por %p33, %p34
    %p36 = scmp.ne.s32.totalorder %s25, %s26
    %p37 = scmp.eq.s32.totalorder %s17, 0
    %p38 = por %p36, %p37
    %p39 = scmp.ne.s32.totalorder %s25, %s26
    %p40 = scmp.eq.s32.totalorder %s18, 1
    %p41 = por %p39, %p40
    %p43 = scmp.ne.s32.totalorder %s26, %s42
    %p44 = scmp.eq.s32.totalorder %s18, 0
    %p45 = por %p43, %p44
    %s47 = sadd.s32 %s46, 1
    %p50 = scmp.eq.s32.totalorder %s12, 1
    %p51 = scmp.ne.s32.totalorder %s46, %s48
    %p52 = scmp.eq.s32.totalorder %s12, 0
    %p53 = por %p51, %p52
    %p54 = scmp.ne.s32.totalorder %s46, %s48
    %p55 = scmp.eq.s32.totalorder %s17, 1
    %p56 = por %p54, %p55
    %p57 = scmp.ne.s32.totalorder %s48, %s49
    %p58 = scmp.eq.s32.totalorder %s17, 0
    %p59 = por %p57, %p58
    %p60 = scmp.ne.s32.totalorder %s48, %s49
    %p61 = scmp.eq.s32.totalorder %s18, 1
    %p62 = por %p60, %p61
    %p64 = scmp.ne.s32.totalorder %s49, %s63
    %p65 = scmp.eq.s32.totalorder %s18, 0
    %p66 = por %p64, %p65
    %s68 = sadd.s32 %s67, 1
    %p71 = scmp.eq.s32.totalorder %s12, 1
    %p72 = scmp.ne.s32.totalorder %s67, %s69
    %p73 = scmp.eq.s32.totalorder %s12, 0
    %p74 = por %p72, %p73
    %p75 = scmp.ne.s32.totalorder %s67, %s69
    %p76 = scmp.eq.s32.totalorder %s17, 1
    %p77 = por %p75, %p76
    %p78 = scmp.ne.s32.totalorder %s69, %s70
    %p79 = scmp.eq.s32.totalorder %s17, 0
    %p80 = por %p78, %p79
    %p81 = scmp.ne.s32.totalorder %s69, %s70
    %p82 = scmp.eq.s32.totalorder %s18, 1
    %p83 = por %p81, %p82
    %p85 = scmp.ne.s32.totalorder %s70, %s84
    %p86 = scmp.eq.s32.totalorder %s18, 0
    %p87 = por %p85, %p86
    %s88 = ssub.s32 %s12, %s19
    %p89 = scmp.eq.s32.totalorder %s88, 0
    %s91 = sadd.s32 %s90, 1
    %s92 = scalar_select %p89, %s90, %s91
    %p95 = pneg %p89
    %p96 = scmp.eq.s32.totalorder %s12, 1
    %p97 = por %p95, %p96
    %p98 = scmp.ne.s32.totalorder %s90, %s93
    %p99 = scmp.eq.s32.totalorder %s12, 0
    %p100 = por %p98, %p99
    %p101 = scmp.ne.s32.totalorder %s90, %s93
    %p102 = scmp.eq.s32.totalorder %s17, 1
    %p103 = por %p101, %p102
    %p104 = scmp.ne.s32.totalorder %s93, %s94
    %p105 = scmp.eq.s32.totalorder %s17, 0
    %p106 = por %p104, %p105
    %p107 = scmp.ne.s32.totalorder %s93, %s94
    %p108 = scmp.eq.s32.totalorder %s18, 1
    %p109 = por %p107, %p108
    %p111 = scmp.ne.s32.totalorder %s94, %s110
    %p112 = scmp.eq.s32.totalorder %s18, 0
    %p113 = por %p111, %p112
    %s114 = ssub.s32 %s12, %s19
    %p115 = scmp.eq.s32.totalorder %s114, 0
    %s117 = sadd.s32 %s116, 1
    %s118 = scalar_select %p115, %s116, %s117
    %p121 = pneg %p115
    %p122 = scmp.eq.s32.totalorder %s12, 1
    %p123 = por %p121, %p122
    %p124 = scmp.ne.s32.totalorder %s116, %s119
    %p125 = scmp.eq.s32.totalorder %s12, 0
    %p126 = por %p124, %p125
    %p127 = scmp.ne.s32.totalorder %s116, %s119
    %p128 = scmp.eq.s32.totalorder %s17, 1
    %p129 = por %p127, %p128
    %p130 = scmp.ne.s32.totalorder %s119, %s120
    %p131 = scmp.eq.s32.totalorder %s17, 0
    %p132 = por %p130, %p131
    %p133 = scmp.ne.s32.totalorder %s119, %s120
    %p134 = scmp.eq.s32.totalorder %s18, 1
    %p135 = por %p133, %p134
    %p137 = scmp.ne.s32.totalorder %s120, %s136
    %p138 = scmp.eq.s32.totalorder %s18, 0
    %p139 = por %p137, %p138
    %s140 = ssub.s32 %s12, %s19
    %p141 = scmp.eq.s32.totalorder %s140, 0
    %s143 = sadd.s32 %s142, 1
    %s144 = scalar_select %p141, %s142, %s143
    %p147 = pneg %p141
    %p148 = scmp.eq.s32.totalorder %s12, 1
    %p149 = por %p147, %p148
    %p150 = scmp.ne.s32.totalorder %s142, %s145
    %p151 = scmp.eq.s32.totalorder %s12, 0
    %p152 = por %p150, %p151
    %p153 = scmp.ne.s32.totalorder %s142, %s145
    %p154 = scmp.eq.s32.totalorder %s17, 1
    %p155 = por %p153, %p154
    %p156 = scmp.ne.s32.totalorder %s145, %s146
    %p157 = scmp.eq.s32.totalorder %s17, 0
    %p158 = por %p156, %p157
    %p159 = scmp.ne.s32.totalorder %s145, %s146
    %p160 = scmp.eq.s32.totalorder %s18, 1
    %p161 = por %p159, %p160
    %p163 = scmp.ne.s32.totalorder %s146, %s162
    %p164 = scmp.eq.s32.totalorder %s18, 0
    %p165 = por %p163, %p164
    %p166 = scmp.le.s32.totalorder 1, %s12
    %p167 = scmp.lt.s32.totalorder %s12, 3
    %p168 = pnand %p166, %p167
    %p169 = pneg %p168
    // Predicated region
    $region9: #{double_conv.6} parent=5 // pred_check
      _
    $region10: #{double_conv.6} parent=5 // pred_check_branch
      %171 = sbr.rel (%p168) target = $region12
    $region11: #{double_conv.6} parent=5 // pred_region
      %s172 = ssub.s32 %s12, 1
      // Predicated region
      $region13: #{double_conv.6} parent=11 // pred_check
        %p173 = pneg %p59
      $region14: #{double_conv.6} parent=11 // pred_check_branch
        %175 = sbr.rel (%p173) target = $region16
      $region15: #{double_conv.6} parent=11 // pred_region
        _
      $region16: #{double_conv.6} parent=11 // pred_fallthru
        _
      // Predicated region
      $region17: #{double_conv.6} parent=11 // pred_check
        %p176 = pneg %p80
      $region18: #{double_conv.6} parent=11 // pred_check_branch
        %178 = sbr.rel (%p176) target = $region20
      $region19: #{double_conv.6} parent=11 // pred_region
        _
      $region20: #{double_conv.6} parent=11 // pred_fallthru
        _
    $region12: #{double_conv.6} parent=5 // pred_fallthru
      _
    %p179 = scmp.lt.s32.totalorder %s12, 2
    // Predicated region
    $region21: #{double_conv.6} parent=5 // pred_check
      %p180 = pneg %p179
    $region22: #{double_conv.6} parent=5 // pred_check_branch
      %182 = sbr.rel (%p180) target = $region24
    $region23: #{double_conv.6} parent=5 // pred_region
      // Predicated region
      $region25: #{double_conv.6} parent=23 // pred_check
        %p183 = pneg %p32
      $region26: #{double_conv.6} parent=23 // pred_check_branch
        %185 = sbr.rel (%p183) target = $region28
      $region27: #{double_conv.6} parent=23 // pred_region
        %p186 = scmp.lt.s32.totalorder %s12, 1
        %s187 = scalar_select %p186, %s12, 1
        %s188 = smul.addr %s187, 6
        %s189 = smul.addr %s188, 8
        %s190 = scalar_lea.vmem %s0, %s189
      $region28: #{double_conv.6} parent=23 // pred_fallthru
        _
    $region24: #{double_conv.6} parent=5 // pred_fallthru
      _
    %p191 = scmp.le.s32.totalorder 1, %s12
    %p192 = scmp.lt.s32.totalorder %s12, 3
    %p193 = pnand %p191, %p192
    %p194 = pneg %p193
    // Predicated region
    $region29: #{double_conv.6} parent=5 // pred_check
      _
    $region30: #{double_conv.6} parent=5 // pred_check_branch
      %196 = sbr.rel (%p193) target = $region32
    $region31: #{double_conv.6} parent=5 // pred_region
      %s197 = ssub.s32 %s12, 1
      %p198 = scmp.lt.s32.totalorder %s17, 1
      %s199 = scalar_select %p198, %s17, 1
      %s200 = smul.addr %s199, 6
      %s201 = smul.addr %s200, 8
      %s202 = scalar_lea.vmem %s0, %s201
      %p203 = pneg %p38
      %p204 = pneg %p35
      %p205 = pneg %p59
      %p206 = pneg %p56
      %p207 = pneg %p80
      %p208 = pneg %p77
      %p209 = pneg %p106
      %p210 = pneg %p103
      %p211 = scmp.lt.s32.totalorder %s17, 1
      %s212 = scalar_select %p211, %s17, 1
      %s213 = smul.addr %s212, 2
      %s214 = smul.addr %s213, 8
      %s215 = scalar_lea.vmem %s3, %s214
      %p216 = pneg %p132
      %p217 = pneg %p129
      %p218 = scmp.lt.s32.totalorder %s17, 1
      %s219 = scalar_select %p218, %s17, 1
      %s220 = scalar_lea.vmem %s4, %s219
      %p221 = pneg %p158
      %p222 = pneg %p155
      %p223 = scmp.lt.s32.totalorder %s17, 1
      %s224 = scalar_select %p223, %s17, 1
      %s225 = scalar_lea.vmem %s5, %s224
      %p226 = scmp.lt.s32.totalorder %s17, 1
      %s227 = scalar_select %p226, %s17, 1
      %s228 = smul.addr %s227, 6
      %s229 = smul.addr %s228, 8
      %s230 = scalar_lea.vmem %s0, %s229
      %p231 = scmp.lt.s32.totalorder %s17, 1
      %s232 = scalar_select %p231, %s17, 1
      %s233 = smul.addr %s232, 2
      %s234 = smul.addr %s233, 8
      %s235 = scalar_lea.vmem %s3, %s234
      %p236 = scmp.lt.s32.totalorder %s17, 1
      %s237 = scalar_select %p236, %s17, 1
      %s238 = scalar_lea.vmem %s4, %s237
      %p239 = scmp.lt.s32.totalorder %s17, 1
      %s240 = scalar_select %p239, %s17, 1
      %s241 = scalar_lea.vmem %s5, %s240
      %v242 = vld [vmem:[%s230] sm:$0xff]
      %v243 = vld [vmem:[%s230 + $0x8] sm:$0xff]
      %v244 = vld [vmem:[%s230 + $0x10] sm:$0xff]
      %v245 = vld [vmem:[%s230 + $0x18] sm:$0xff]
      %v246 = vld [vmem:[%s230 + $0x20] sm:$0x3]
      %v247 = vld [vmem:[%s230 + $0x28] sm:$0x3]
      %v248 = vld [vmem:[%s1] sm:$0xff]
      %v249 = vld [vmem:[%s1 + $0x8] sm:$0xff]
      %v250 = vld [vmem:[%s1 + $0x10] sm:$0xff]
      %v251 = vld [vmem:[%s1 + $0x18] sm:$0xff]
      %v252 = vld [vmem:[%s1 + $0x20] sm:$0xff]
      %v253 = vld [vmem:[%s1 + $0x28] sm:$0xff]
      %v254 = vld [vmem:[%s1 + $0x30] sm:$0xff]
      %v255 = vld [vmem:[%s1 + $0x38] sm:$0xff]
      %v256 = vld [vmem:[%s1 + $0x40] sm:$0xff]
      %v257 = vld [vmem:[%s1 + $0x48] sm:$0xff]
      %v258 = vld [vmem:[%s1 + $0x50] sm:$0xff]
      %v259 = vld [vmem:[%s1 + $0x58] sm:$0xff]
      %v260 = vld [vmem:[%s1 + $0x60] sm:$0xff]
      %v261 = vld [vmem:[%s1 + $0x68] sm:$0xff]
      %v262 = vld [vmem:[%s1 + $0x70] sm:$0xff]
      %v263 = vld [vmem:[%s1 + $0x78] sm:$0xff]
      %v264 = vld [vmem:[%s1 + $0x80] sm:$0xff]
      %v265 = vld [vmem:[%s1 + $0x88] sm:$0xff]
      %s266 = scalar_lea.vmem %s1, 144
      %v267 = vld [vmem:[%s266] sm:$0xff]
      %v268 = vld [vmem:[%s266 + $0x8] sm:$0xff]
      %v269 = vld [vmem:[%s266 + $0x10] sm:$0xff]
      %v270 = vld [vmem:[%s266 + $0x18] sm:$0xff]
      %v271 = vld [vmem:[%s266 + $0x20] sm:$0xff]
      %v272 = vld [vmem:[%s266 + $0x28] sm:$0xff]
      %v273 = vld [vmem:[%s266 + $0x30] sm:$0xff]
      %v274 = vld [vmem:[%s266 + $0x38] sm:$0xff]
      %v275 = vld [vmem:[%s266 + $0x40] sm:$0xff]
      %v276 = vld [vmem:[%s266 + $0x48] sm:$0xff]
      %v277 = vld [vmem:[%s266 + $0x50] sm:$0xff]
      %v278 = vld [vmem:[%s266 + $0x58] sm:$0xff]
      %v279 = vld [vmem:[%s266 + $0x60] sm:$0xff]
      %v280 = vld [vmem:[%s266 + $0x68] sm:$0xff]
      %v281 = vld [vmem:[%s266 + $0x70] sm:$0xff]
      %v282 = vld [vmem:[%s266 + $0x78] sm:$0xff]
      %v283 = vld [vmem:[%s266 + $0x80] sm:$0xff]
      %v284 = vld [vmem:[%s266 + $0x88] sm:$0xff]
      %vm291 = vcmask 1046528
      %v292 = vrot.slane %v242, 1
      %v293 = vrot.slane %v244, 1
      %v294 = vsel %vm291, %v292, %v293
      %v295 = vrot.slane %v243, 1
      %v296 = vrot.slane %v245, 1
      %v297 = vsel %vm291, %v295, %v296
      %v298 = vrot.slane %v246, 1
      %v299 = vsel %vm291, %v293, %v298
      %v300 = vrot.slane %v247, 1
      %v301 = vsel %vm291, %v296, %v300
      %vm304 = vcmask 130048
      %v305 = vsel %vm304, %v297, 0
      %v307 = vsel %vm304, %v301, 0
      %309 = vmatprep.subr.mxu0 0.0
      %310 = vmatpush1.msra.mxu0 %v267
      %311 = vmatprep.subr.mxu0 0.0
      %312 = vmatpush1.msra.mxu0 %v268
      %313 = vmatprep.subr.mxu0 0.0
      %314 = vmatpush1.msra.mxu0 %v269
      %315 = vmatprep.subr.mxu0 0.0
      %316 = vmatpush1.msra.mxu0 %v270
      %317 = vmatprep.subr.mxu0 0.0
      %318 = vmatpush1.msra.mxu0 %v271
      %319 = vmatprep.subr.mxu0 0.0
      %320 = vmatpush1.msra.mxu0 %v272
      %321 = vmatprep.subr.mxu0 0.0
      %322 = vmatpush1.msra.mxu0 %v273
      %323 = vmatprep.subr.mxu0 0.0
      %324 = vmatpush1.msra.mxu0 %v274
      %325 = vmatprep.subr.mxu0 0.0
      %326 = vmatpush1.msra.mxu0 %v275
      %327 = vmatprep.subr.mxu0 0.0
      %328 = vmatpush1.msra.mxu0 %v276
      %329 = vmatprep.subr.mxu0 0.0
      %330 = vmatpush1.msra.mxu0 %v277
      %331 = vmatprep.subr.mxu0 0.0
      %332 = vmatpush1.msra.mxu0 %v278
      %333 = vmatprep.subr.mxu0 0.0
      %334 = vmatpush1.msra.mxu0 %v279
      %335 = vmatprep.subr.mxu0 0.0
      %336 = vmatpush1.msra.mxu0 %v280
      %337 = vmatprep.subr.mxu0 0.0
      %338 = vmatpush1.msra.mxu0 %v281
      %339 = vmatprep.subr.mxu0 0.0
      %340 = vmatpush1.msra.mxu0 %v282
      %341 = vmatprep.subr.mxu0 0.0
      %342 = vmatpush1.msra.mxu0 %v283
      %343 = vmatprep.subr.mxu0 0.0
      %344 = vmatpush1.msra.mxu0 %v284
      %345 = vmatprep.subr.mxu0 0.0
      %346 = vmatpush1.msra.mxu0 0.0
      %347 = vmatprep.subr.mxu0 0.0
      %348 = vmatpush1.msra.mxu0 0.0
      %349 = vmatprep.subr.mxu0 0.0
      %350 = vmatpush1.msra.mxu0 0.0
      %351 = vmatprep.subr.mxu0 0.0
      %352 = vmatpush1.msra.mxu0 0.0
      %353 = vmatprep.subr.mxu0 0.0
      %354 = vmatpush1.msra.mxu0 0.0
      %355 = vmatprep.subr.mxu0 0.0
      %356 = vmatpush1.msra.mxu0 0.0
      %357 = vmatprep.subr.mxu0 0.0
      %358 = vmatpush1.msra.mxu0 0.0
      %359 = vmatprep.subr.mxu0 0.0
      %360 = vmatpush1.msra.mxu0 0.0
      %361 = vmatprep.subr.mxu0 0.0
      %362 = vmatpush1.msra.mxu0 0.0
      %363 = vmatprep.subr.mxu0 0.0
      %364 = vmatpush1.msra.mxu0 0.0
      %365 = vmatprep.subr.mxu0 0.0
      %366 = vmatpush1.msra.mxu0 0.0
      %367 = vmatprep.subr.mxu0 0.0
      %368 = vmatpush1.msra.mxu0 0.0
      %369 = vmatprep.subr.mxu0 0.0
      %370 = vmatpush1.msra.mxu0 0.0
      %371 = vmatprep.subr.mxu0 0.0
      %372 = vmatpush1.msra.mxu0 0.0
      %373 = vmatprep.mubr.f32.mxu0 %v305
      %374 = vmatmul.mubr.f32.gmra.mrb[0].mxu0 %v294
      %v375 = vpop.f32.mrb[0].mxu0
      %v376 = vadd.f32 0.0, %v375
      %v377 = vpop.f32.mrb[0].mxu0
      %378 = vmatprep.mubr.f32.mxu0 %v307
      %379 = vmatmul.mubr.f32.gmra.mrb[0].mxu0 %v299
      %v380 = vpop.f32.mrb[0].mxu0
      %v381 = vadd.f32 0.0, %v380
      %v382 = vpop.f32.mrb[0].mxu0
      %383 = vdwg.mxu0
      %v384 = vsel %vm304, %v243, 0
      %v386 = vsel %vm304, %v245, 0
      %388 = vmatprep.subr.mxu0 0.0
      %389 = vmatpush1.msra.mxu0 %v248
      %390 = vmatprep.subr.mxu0 0.0
      %391 = vmatpush1.msra.mxu0 %v249
      %392 = vmatprep.subr.mxu0 0.0
      %393 = vmatpush1.msra.mxu0 %v250
      %394 = vmatprep.subr.mxu0 0.0
      %395 = vmatpush1.msra.mxu0 %v251
      %396 = vmatprep.subr.mxu0 0.0
      %397 = vmatpush1.msra.mxu0 %v252
      %398 = vmatprep.subr.mxu0 0.0
      %399 = vmatpush1.msra.mxu0 %v253
      %400 = vmatprep.subr.mxu0 0.0
      %401 = vmatpush1.msra.mxu0 %v254
      %402 = vmatprep.subr.mxu0 0.0
      %403 = vmatpush1.msra.mxu0 %v255
      %404 = vmatprep.subr.mxu0 0.0
      %405 = vmatpush1.msra.mxu0 %v256
      %406 = vmatprep.subr.mxu0 0.0
      %407 = vmatpush1.msra.mxu0 %v257
      %408 = vmatprep.subr.mxu0 0.0
      %409 = vmatpush1.msra.mxu0 %v258
      %410 = vmatprep.subr.mxu0 0.0
      %411 = vmatpush1.msra.mxu0 %v259
      %412 = vmatprep.subr.mxu0 0.0
      %413 = vmatpush1.msra.mxu0 %v260
      %414 = vmatprep.subr.mxu0 0.0
      %415 = vmatpush1.msra.mxu0 %v261
      %416 = vmatprep.subr.mxu0 0.0
      %417 = vmatpush1.msra.mxu0 %v262
      %418 = vmatprep.subr.mxu0 0.0
      %419 = vmatpush1.msra.mxu0 %v263
      %420 = vmatprep.subr.mxu0 0.0
      %421 = vmatpush1.msra.mxu0 %v264
      %422 = vmatprep.subr.mxu0 0.0
      %423 = vmatpush1.msra.mxu0 %v265
      %424 = vmatprep.subr.mxu0 0.0
      %425 = vmatpush1.msra.mxu0 0.0
      %426 = vmatprep.subr.mxu0 0.0
      %427 = vmatpush1.msra.mxu0 0.0
      %428 = vmatprep.subr.mxu0 0.0
      %429 = vmatpush1.msra.mxu0 0.0
      %430 = vmatprep.subr.mxu0 0.0
      %431 = vmatpush1.msra.mxu0 0.0
      %432 = vmatprep.subr.mxu0 0.0
      %433 = vmatpush1.msra.mxu0 0.0
      %434 = vmatprep.subr.mxu0 0.0
      %435 = vmatpush1.msra.mxu0 0.0
      %436 = vmatprep.subr.mxu0 0.0
      %437 = vmatpush1.msra.mxu0 0.0
      %438 = vmatprep.subr.mxu0 0.0
      %439 = vmatpush1.msra.mxu0 0.0
      %440 = vmatprep.subr.mxu0 0.0
      %441 = vmatpush1.msra.mxu0 0.0
      %442 = vmatprep.subr.mxu0 0.0
      %443 = vmatpush1.msra.mxu0 0.0
      %444 = vmatprep.subr.mxu0 0.0
      %445 = vmatpush1.msra.mxu0 0.0
      %446 = vmatprep.subr.mxu0 0.0
      %447 = vmatpush1.msra.mxu0 0.0
      %448 = vmatprep.subr.mxu0 0.0
      %449 = vmatpush1.msra.mxu0 0.0
      %450 = vmatprep.subr.mxu0 0.0
      %451 = vmatpush1.msra.mxu0 0.0
      %452 = vmatprep.mubr.f32.mxu0 %v384
      %453 = vmatmul.mubr.f32.gmra.mrb[0].mxu0 %v242
      %v454 = vpop.f32.mrb[0].mxu0
      %v455 = vadd.f32 %v376, %v454
      %v456 = vpop.f32.mrb[0].mxu0
      %457 = vmatprep.mubr.f32.mxu0 %v386
      %458 = vmatmul.mubr.f32.gmra.mrb[0].mxu0 %v244
      %v459 = vpop.f32.mrb[0].mxu0
      %v460 = vadd.f32 %v381, %v459
      %v461 = vpop.f32.mrb[0].mxu0
      %462 = vdwg.mxu0
      %s463 = scalar_lea.vmem %s1, 288
      %v464 = vld [vmem:[%s463] sm:$0xff]
      %v465 = vld [vmem:[%s463 + $0x8] sm:$0xff]
      %v466 = vld [vmem:[%s463 + $0x10] sm:$0xff]
      %v467 = vld [vmem:[%s463 + $0x18] sm:$0xff]
      %v468 = vld [vmem:[%s463 + $0x20] sm:$0xff]
      %v469 = vld [vmem:[%s463 + $0x28] sm:$0xff]
      %v470 = vld [vmem:[%s463 + $0x30] sm:$0xff]
      %v471 = vld [vmem:[%s463 + $0x38] sm:$0xff]
      %v472 = vld [vmem:[%s463 + $0x40] sm:$0xff]
      %v473 = vld [vmem:[%s463 + $0x48] sm:$0xff]
      %v474 = vld [vmem:[%s463 + $0x50] sm:$0xff]
      %v475 = vld [vmem:[%s463 + $0x58] sm:$0xff]
      %v476 = vld [vmem:[%s463 + $0x60] sm:$0xff]
      %v477 = vld [vmem:[%s463 + $0x68] sm:$0xff]
      %v478 = vld [vmem:[%s463 + $0x70] sm:$0xff]
      %v479 = vld [vmem:[%s463 + $0x78] sm:$0xff]
      %v480 = vld [vmem:[%s463 + $0x80] sm:$0xff]
      %v481 = vld [vmem:[%s463 + $0x88] sm:$0xff]
      %vm482 = vcmask 1045504
      %v483 = vrot.slane %v242, 2
      %v484 = vrot.slane %v244, 2
      %v485 = vsel %vm482, %v483, %v484
      %v486 = vrot.slane %v243, 2
      %v487 = vrot.slane %v245, 2
      %v488 = vsel %vm482, %v486, %v487
      %v489 = vrot.slane %v246, 2
      %v490 = vsel %vm482, %v484, %v489
      %v491 = vrot.slane %v247, 2
      %v492 = vsel %vm482, %v487, %v491
      %v495 = vsel %vm304, %v488, 0
      %v497 = vsel %vm304, %v492, 0
      %499 = vmatprep.subr.mxu0 0.0
      %500 = vmatpush1.msra.mxu0 %v464
      %501 = vmatprep.subr.mxu0 0.0
      %502 = vmatpush1.msra.mxu0 %v465
      %503 = vmatprep.subr.mxu0 0.0
      %504 = vmatpush1.msra.mxu0 %v466
      %505 = vmatprep.subr.mxu0 0.0
      %506 = vmatpush1.msra.mxu0 %v467
      %507 = vmatprep.subr.mxu0 0.0
      %508 = vmatpush1.msra.mxu0 %v468
      %509 = vmatprep.subr.mxu0 0.0
      %510 = vmatpush1.msra.mxu0 %v469
      %511 = vmatprep.subr.mxu0 0.0
      %512 = vmatpush1.msra.mxu0 %v470
      %513 = vmatprep.subr.mxu0 0.0
      %514 = vmatpush1.msra.mxu0 %v471
      %515 = vmatprep.subr.mxu0 0.0
      %516 = vmatpush1.msra.mxu0 %v472
      %517 = vmatprep.subr.mxu0 0.0
      %518 = vmatpush1.msra.mxu0 %v473
      %519 = vmatprep.subr.mxu0 0.0
      %520 = vmatpush1.msra.mxu0 %v474
      %521 = vmatprep.subr.mxu0 0.0
      %522 = vmatpush1.msra.mxu0 %v475
      %523 = vmatprep.subr.mxu0 0.0
      %524 = vmatpush1.msra.mxu0 %v476
      %525 = vmatprep.subr.mxu0 0.0
      %526 = vmatpush1.msra.mxu0 %v477
      %527 = vmatprep.subr.mxu0 0.0
      %528 = vmatpush1.msra.mxu0 %v478
      %529 = vmatprep.subr.mxu0 0.0
      %530 = vmatpush1.msra.mxu0 %v479
      %531 = vmatprep.subr.mxu0 0.0
      %532 = vmatpush1.msra.mxu0 %v480
      %533 = vmatprep.subr.mxu0 0.0
      %534 = vmatpush1.msra.mxu0 %v481
      %535 = vmatprep.subr.mxu0 0.0
      %536 = vmatpush1.msra.mxu0 0.0
      %537 = vmatprep.subr.mxu0 0.0
      %538 = vmatpush1.msra.mxu0 0.0
      %539 = vmatprep.subr.mxu0 0.0
      %540 = vmatpush1.msra.mxu0 0.0
      %541 = vmatprep.subr.mxu0 0.0
      %542 = vmatpush1.msra.mxu0 0.0
      %543 = vmatprep.subr.mxu0 0.0
      %544 = vmatpush1.msra.mxu0 0.0
      %545 = vmatprep.subr.mxu0 0.0
      %546 = vmatpush1.msra.mxu0 0.0
      %547 = vmatprep.subr.mxu0 0.0
      %548 = vmatpush1.msra.mxu0 0.0
      %549 = vmatprep.subr.mxu0 0.0
      %550 = vmatpush1.msra.mxu0 0.0
      %551 = vmatprep.subr.mxu0 0.0
      %552 = vmatpush1.msra.mxu0 0.0
      %553 = vmatprep.subr.mxu0 0.0
      %554 = vmatpush1.msra.mxu0 0.0
      %555 = vmatprep.subr.mxu0 0.0
      %556 = vmatpush1.msra.mxu0 0.0
      %557 = vmatprep.subr.mxu0 0.0
      %558 = vmatpush1.msra.mxu0 0.0
      %559 = vmatprep.subr.mxu0 0.0
      %560 = vmatpush1.msra.mxu0 0.0
      %561 = vmatprep.subr.mxu0 0.0
      %562 = vmatpush1.msra.mxu0 0.0
      %563 = vmatprep.mubr.f32.mxu0 %v495
      %564 = vmatmul.mubr.f32.gmra.mrb[0].mxu0 %v485
      %v565 = vpop.f32.mrb[0].mxu0
      %v566 = vadd.f32 0.0, %v565
      %v567 = vpop.f32.mrb[0].mxu0
      %568 = vmatprep.mubr.f32.mxu0 %v497
      %569 = vmatmul.mubr.f32.gmra.mrb[0].mxu0 %v490
      %v570 = vpop.f32.mrb[0].mxu0
      %v571 = vadd.f32 0.0, %v570
      %v572 = vpop.f32.mrb[0].mxu0
      %573 = vdwg.mxu0
      %v574 = vadd.f32 %v455, %v566
      %v575 = vadd.f32 %v460, %v571
      %v576 = vld [vmem:[%s2] sm:$0x1]
      %v578 = vlaneseq
      %v579 = vshrl.u32 %v578, 7
      %v580 = vsub.s32 0, %v579
      %v581 = vrot.slane %v576, %v580
      %v583 = vadd.f32 %v574, %v581
      %v584 = vadd.f32 %v575, %v581
      %585 = vst [vmem:[%s235] sm:$0xff] %v583
      %586 = vst [vmem:[%s235 + $0x8] sm:$0xff] %v584
      %v587 = vadd.f32 %v583, %v584
      %v588 = vrot.slane %v587, 4
      %v589 = vadd.f32 %v587, %v588
      %v590 = vrot.slane %v589, 2
      %v591 = vadd.f32 %v589, %v590
      %v592 = vrot.slane %v591, 1
      %v593 = vadd.f32 %v591, %v592
      %594 = vst [vmem:[%s238] sm:$0x1] %v593
      %v595 = vmul.f32 %v583, %v583
      %v596 = vmul.f32 %v584, %v584
      %v597 = vadd.f32 %v595, %v596
      %v598 = vrot.slane %v597, 4
      %v599 = vadd.f32 %v597, %v598
      %v600 = vrot.slane %v599, 2
      %v601 = vadd.f32 %v599, %v600
      %v602 = vrot.slane %v601, 1
      %v603 = vadd.f32 %v601, %v602
      %604 = vst [vmem:[%s241] sm:$0x1] %v603
      %p605 = scmp.lt.s32.totalorder %s17, 1
      %s606 = scalar_select %p605, %s17, 1
      %s607 = smul.addr %s606, 2
      %s608 = smul.addr %s607, 8
      %s609 = scalar_lea.vmem %s3, %s608
      %p610 = scmp.lt.s32.totalorder %s17, 1
      %s611 = scalar_select %p610, %s17, 1
      %s612 = scalar_lea.vmem %s4, %s611
      %p613 = scmp.lt.s32.totalorder %s17, 1
      %s614 = scalar_select %p613, %s17, 1
      %s615 = scalar_lea.vmem %s5, %s614
      // Predicated region
      $region33: #{double_conv.6} parent=31 // pred_check
        %p616 = pneg %p103
      $region34: #{double_conv.6} parent=31 // pred_check_branch
        %618 = sbr.rel (%p616) target = $region36
      $region35: #{double_conv.6} parent=31 // pred_region
        _
      $region36: #{double_conv.6} parent=31 // pred_fallthru
        _
      // Predicated region
      $region37: #{double_conv.6} parent=31 // pred_check
        %p619 = pneg %p129
      $region38: #{double_conv.6} parent=31 // pred_check_branch
        %621 = sbr.rel (%p619) target = $region40
      $region39: #{double_conv.6} parent=31 // pred_region
        _
      $region40: #{double_conv.6} parent=31 // pred_fallthru
        _
      // Predicated region
      $region41: #{double_conv.6} parent=31 // pred_check
        %p622 = pneg %p155
      $region42: #{double_conv.6} parent=31 // pred_check_branch
        %624 = sbr.rel (%p622) target = $region44
      $region43: #{double_conv.6} parent=31 // pred_region
        _
      $region44: #{double_conv.6} parent=31 // pred_fallthru
        _
    $region32: #{double_conv.6} parent=5 // pred_fallthru
      _
    %p625 = scmp.le.s32.totalorder 2, %s12
    // Predicated region
    $region45: #{double_conv.6} parent=5 // pred_check
      %p626 = pneg %p625
    $region46: #{double_conv.6} parent=5 // pred_check_branch
      %628 = sbr.rel (%p626) target = $region48
    $region47: #{double_conv.6} parent=5 // pred_region
      %s629 = ssub.s32 %s12, 2
      // Predicated region
      $region49: #{double_conv.6} parent=47 // pred_check
        %p630 = pneg %p109
      $region50: #{double_conv.6} parent=47 // pred_check_branch
        %632 = sbr.rel (%p630) target = $region52
      $region51: #{double_conv.6} parent=47 // pred_region
        %p633 = scmp.lt.s32.totalorder %s18, 1
        %s634 = scalar_select %p633, %s18, 1
        %s635 = smul.addr %s634, 2
        %s636 = smul.addr %s635, 8
        %s637 = scalar_lea.vmem %s3, %s636
      $region52: #{double_conv.6} parent=47 // pred_fallthru
        _
      // Predicated region
      $region53: #{double_conv.6} parent=47 // pred_check
        %p638 = pneg %p135
      $region54: #{double_conv.6} parent=47 // pred_check_branch
        %640 = sbr.rel (%p638) target = $region56
      $region55: #{double_conv.6} parent=47 // pred_region
        %p641 = scmp.lt.s32.totalorder %s18, 1
        %s642 = scalar_select %p641, %s18, 1
        %s643 = scalar_lea.vmem %s4, %s642
      $region56: #{double_conv.6} parent=47 // pred_fallthru
        _
      // Predicated region
      $region57: #{double_conv.6} parent=47 // pred_check
        %p644 = pneg %p161
      $region58: #{double_conv.6} parent=47 // pred_check_branch
        %646 = sbr.rel (%p644) target = $region60
      $region59: #{double_conv.6} parent=47 // pred_region
        %p647 = scmp.lt.s32.totalorder %s18, 1
        %s648 = scalar_select %p647, %s18, 1
        %s649 = scalar_lea.vmem %s5, %s648
      $region60: #{double_conv.6} parent=47 // pred_fallthru
        _
    $region48: #{double_conv.6} parent=5 // pred_fallthru
      _
  $region6: #{double_conv.6} parent=0 // loop_footer
    %s16 = sadd.s32 1, %s12
  $region7: #{double_conv.6} parent=0 // loop_footer_branch
    %11 = sbr.rel target = $region3
  $region8: #{double_conv.6} parent=0 // loop_exit
    _

</llo_original>
